<compile_context>
chip_gen: v7x
topology: tpu7x:2x2x1
jax: 0.10.0
libtpu: 0.0.40
codegen_flags: <defaults>
</compile_context>

<pallas_src>
import functools

import jax
import jax.numpy as jnp
from jax import lax
from jax.experimental import pallas as pl
from jax.experimental.pallas import tpu as pltpu


def _round_up(x, m):
    return (x + m - 1) // m * m


def _cdiv(a, b):
    return (a + b - 1) // b


def _sublane_multiple(dt):
    # Minimum sublane tile: 8 for 32-bit, 16 for 16-bit, 32 for 8-bit dtypes.
    return 8 * max(1, 4 // jnp.dtype(dt).itemsize)


def _vmem_capacity_bytes():
    try:
        cap = getattr(pltpu.get_tpu_info(), "vmem_capacity_bytes", None)
        if cap:
            return int(cap)
    except Exception:
        pass
    return 64 << 20  # conservative default (v7x per-TC); v5e/v6e have 128 MiB.


def _layernorm_epilogue(acc, b_ref, res_ref, g_ref, beta_ref, o_ref, eps, inv_n):
    """bias + residual + LayerNorm (all f32), write out in o_ref.dtype."""
    x = acc + b_ref[...].astype(jnp.float32) + res_ref[...].astype(jnp.float32)
    mean = jnp.sum(x, axis=-1, keepdims=True) * inv_n
    xc = x - mean
    var = jnp.sum(xc * xc, axis=-1, keepdims=True) * inv_n   # biased, like torch
    y = xc * lax.rsqrt(var + eps)                             # EUP slot, no divide
    y = y * g_ref[...].astype(jnp.float32) + beta_ref[...].astype(jnp.float32)
    o_ref[...] = y.astype(o_ref.dtype)


def _bert_output_resident_kernel(h_ref, w_ref, b_ref, res_ref, g_ref, beta_ref,
                                 o_ref, *, eps, inv_n, compute_dtype):
    """One row tile: (tm, I) @ (I, H) on the MXU with the weight VMEM-resident."""
    h = h_ref[...]
    if h.dtype != compute_dtype:
        h = h.astype(compute_dtype)   # in-kernel cast: no wrapper HBM pre-pass
    acc = jnp.dot(h, w_ref[...], preferred_element_type=jnp.float32)
    # Dropout is inference-mode identity here.
    # TODO(synk): training-mode dropout would need pltpu.prng_seed/prng_random_bits.
    _layernorm_epilogue(acc, b_ref, res_ref, g_ref, beta_ref, o_ref, eps, inv_n)


def _bert_output_kstream_kernel(h_ref, w_ref, b_ref, res_ref, g_ref, beta_ref,
                                o_ref, acc_ref, *, eps, inv_n, compute_dtype):
    """Weight streamed over the K axis; f32 accumulator; epilogue on last K step."""
    k = pl.program_id(1)

    @pl.when(k == 0)
    def _():
        acc_ref[...] = jnp.zeros_like(acc_ref)

    h = h_ref[...]
    if h.dtype != compute_dtype:
        h = h.astype(compute_dtype)
    acc_ref[...] += jnp.dot(h, w_ref[...], preferred_element_type=jnp.float32)

    @pl.when(k == pl.num_programs(1) - 1)
    def _():
        _layernorm_epilogue(acc_ref[...], b_ref, res_ref, g_ref, beta_ref,
                            o_ref, eps, inv_n)


def bert_output(hidden_states, input_tensor, weight, bias, gamma, beta, *,
                eps=1e-12, tm=512, tk=None, compute_dtype=None, out_dtype=None,
                max_resident_weight_bytes=None):
    """hidden_states: (B, S, I); input_tensor: (B, S, H); weight: (I, H)."""
    B, S, I = hidden_states.shape
    H = input_tensor.shape[-1]
    assert weight.shape == (I, H)
    M = B * S

    out_dtype = jnp.dtype(hidden_states.dtype if out_dtype is None else out_dtype)
    # Note: on v5e (MXU-bound) prefer compute_dtype=jnp.bfloat16 explicitly.
    compute_dtype = jnp.dtype(hidden_states.dtype if compute_dtype is None
                              else compute_dtype)

    # Flatten rows onto the sublane axis. No pad / no cast in the wrapper: the
    # cast happens in-kernel and raggedness is handled by Pallas block masking
    # (garbage in OOB rows is row-local and its stores are discarded).
    h2d = hidden_states.reshape(M, I)
    r2d = input_tensor.reshape(M, H)
    b2d = bias.reshape(1, H)
    g2d = gamma.reshape(1, H)
    beta2d = beta.reshape(1, H)

    # Weight is a one-time (parameter-sized) transfer next to per-row activation
    # traffic: cast once in the wrapper so the VMEM-resident copy is already in
    # compute dtype (half the residency footprint for bf16).
    w = weight if weight.dtype == compute_dtype else weight.astype(compute_dtype)

    cs = compute_dtype.itemsize
    hs = jnp.dtype(h2d.dtype).itemsize
    rs = jnp.dtype(r2d.dtype).itemsize
    os_ = out_dtype.itemsize

    # Sublane alignment comes from the dtypes actually tiled along rows.
    sub = max(_sublane_multiple(h2d.dtype), _sublane_multiple(r2d.dtype),
              _sublane_multiple(out_dtype))

    # Large row tile to amortize the ~0.35us/step overhead, capped so the
    # 'parallel' row axis has >=2 steps (v7x megacore) and never exceeds the
    # sublane-rounded row count.
    tm = _round_up(max(tm, sub), sub)
    tm = min(tm, max(sub, _round_up(_cdiv(M, 2), sub)), _round_up(M, sub))
    m_tiles = _cdiv(M, tm)

    vmem_phys = _vmem_capacity_bytes()
    if max_resident_weight_bytes is None:
        # ~62% of physical per-TC VMEM: ~40 MiB on v7x, ~80 MiB on v5e/v6e.
        max_resident_weight_bytes = (vmem_phys * 5) // 8
    weight_bytes = I * H * cs
    resident = weight_bytes <= max_resident_weight_bytes

    kern_common = dict(eps=float(eps), inv_n=1.0 / H, compute_dtype=compute_dtype)
    cost = pl.CostEstimate(
        flops=2 * M * I * H,
        transcendentals=M,
        bytes_accessed=(M * I * hs + weight_bytes + M * H * rs + M * H * os_
                        + 3 * H * 4),
    )

    def call(use_buffered):
        const_kw = dict(pipeline_mode=pl.Buffered(1)) if use_buffered else {}
        if resident:
            kernel = functools.partial(_bert_output_resident_kernel, **kern_common)
            grid = (m_tiles,)
            in_specs = [
                pl.BlockSpec((tm, I), lambda i: (i, 0)),             # activations
                pl.BlockSpec((I, H), lambda i: (0, 0), **const_kw),  # weight (resident)
                pl.BlockSpec((1, H), lambda i: (0, 0), **const_kw),  # dense bias
                pl.BlockSpec((tm, H), lambda i: (i, 0)),             # residual
                pl.BlockSpec((1, H), lambda i: (0, 0), **const_kw),  # LN gamma
                pl.BlockSpec((1, H), lambda i: (0, 0), **const_kw),  # LN beta
            ]
            out_spec = pl.BlockSpec((tm, H), lambda i: (i, 0))
            scratch = []
            semantics = ("parallel",)
            vmem_bytes = ((1 if use_buffered else 2) * weight_bytes
                          + 2 * tm * I * hs + 2 * tm * H * rs
                          + 2 * tm * H * os_ + 8 * H * 4 + (4 << 20))
        else:
            # K-streaming fallback for weights too large to be VMEM-resident.
            kernel = functools.partial(_bert_output_kstream_kernel, **kern_common)
            tk_ = tk
            if tk_ is None:
                tk_ = next((t for t in (2048, 1024, 512, 256, 128) if I % t == 0), I)
            assert I % tk_ == 0, "K tile must divide intermediate_size"
            k_tiles = I // tk_
            grid = (m_tiles, k_tiles)
            w_kw = dict(pipeline_mode=pl.Buffered(3)) if use_buffered else {}
            in_specs = [
                pl.BlockSpec((tm, tk_), lambda i, k: (i, k)),
                pl.BlockSpec((tk_, H), lambda i, k: (k, 0), **w_kw),
                pl.BlockSpec((1, H), lambda i, k: (0, 0), **const_kw),
                pl.BlockSpec((tm, H), lambda i, k: (i, 0)),
                pl.BlockSpec((1, H), lambda i, k: (0, 0), **const_kw),
                pl.BlockSpec((1, H), lambda i, k: (0, 0), **const_kw),
            ]
            out_spec = pl.BlockSpec((tm, H), lambda i, k: (i, 0))
            scratch = [pltpu.VMEM((tm, H), jnp.float32)]
            semantics = ("parallel", "arbitrary")
            nbuf = 3 if use_buffered else 2
            vmem_bytes = (nbuf * tk_ * H * cs + 2 * tm * tk_ * hs
                          + 2 * tm * H * rs + 2 * tm * H * os_
                          + tm * H * 4 + 8 * H * 4 + (4 << 20))

        # Cap the scoped limit at ~80% of physical per-TC VMEM (leave headroom
        # for compiler scratch; the resident weight is duplicated per TC on v7x).
        vmem_limit = int(min(max(vmem_bytes, 16 << 20), (vmem_phys * 4) // 5))

        out2d = pl.pallas_call(
            kernel,
            out_shape=jax.ShapeDtypeStruct((M, H), out_dtype),
            grid_spec=pltpu.PrefetchScalarGridSpec(
                num_scalar_prefetch=0,
                grid=grid,
                in_specs=in_specs,
                out_specs=out_spec,
                scratch_shapes=scratch,
            ),
            compiler_params=pltpu.CompilerParams(
                dimension_semantics=semantics,
                vmem_limit_bytes=vmem_limit),
            cost_estimate=cost,
        )(h2d, w, b2d, r2d, g2d, beta2d)
        return jax.block_until_ready(out2d)

    try:
        out = call(True)
    except Exception:
        # pipeline_mode=pl.Buffered(...) not supported on this jax version:
        # fall back to default (double-buffered) specs.
        out = call(False)
    return out.reshape(B, S, H)


def _reference(hidden_states, input_tensor, weight, bias, gamma, beta, eps=1e-12):
    x = hidden_states @ weight + bias
    x = x + input_tensor
    mean = jnp.mean(x, axis=-1, keepdims=True)
    var = jnp.mean((x - mean) ** 2, axis=-1, keepdims=True)
    return (x - mean) / jnp.sqrt(var + eps) * gamma + beta


if __name__ == "__main__":
    # Small BERT-like config: batch=2, seq=8, intermediate=512, hidden=128.
    B, S, I, H = 2, 8, 512, 128
    eps = 1e-12

    key = jax.random.PRNGKey(0)
    k1, k2, k3, k4 = jax.random.split(key, 4)

    hidden_states = jax.random.normal(k1, (B, S, I), dtype=jnp.float32)
    input_tensor = jax.random.normal(k2, (B, S, H), dtype=jnp.float32)
    weight = jax.random.normal(k3, (I, H), dtype=jnp.float32) * (1.0 / jnp.sqrt(I))
    bias = jax.random.normal(k4, (H,), dtype=jnp.float32) * 0.02
    gamma = jnp.ones((H,), dtype=jnp.float32)
    beta = jnp.zeros((H,), dtype=jnp.float32)

    ref = _reference(hidden_states, input_tensor, weight, bias, gamma, beta, eps)

    # 1) f32 resident-weight path (numerically matches the reference).
    out = jax.block_until_ready(
        bert_output(hidden_states, input_tensor, weight, bias, gamma, beta, eps=eps))
    assert out.shape == (B, S, H)
    assert jnp.allclose(out, ref, atol=1e-4, rtol=1e-4)

    # 2) bf16-operand path (cast in-kernel); f32 accumulation + f32 LayerNorm,
    #    so deviation from the f32 reference is only operand rounding.
    out_bf16 = jax.block_until_ready(
        bert_output(hidden_states, input_tensor, weight, bias, gamma, beta,
                    eps=eps, compute_dtype=jnp.bfloat16))
    assert out_bf16.shape == (B, S, H)
    assert jnp.allclose(out_bf16, ref, atol=1e-1, rtol=1e-1)

    # 3) Ragged row count (M = 10 not a multiple of the row tile): no wrapper
    #    padding, masked tail tile.
    hs_r, res_r = hidden_states[:, :5], input_tensor[:, :5]
    ref_r = _reference(hs_r, res_r, weight, bias, gamma, beta, eps)
    out_r = jax.block_until_ready(
        bert_output(hs_r, res_r, weight, bias, gamma, beta, eps=eps))
    assert out_r.shape == ref_r.shape
    assert jnp.allclose(out_r, ref_r, atol=1e-4, rtol=1e-4)

    # 4) Forced K-streaming fallback (pretend the weight is too big for VMEM).
    out_ks = jax.block_until_ready(
        bert_output(hidden_states, input_tensor, weight, bias, gamma, beta,
                    eps=eps, max_resident_weight_bytes=0, tk=128))
    assert jnp.allclose(out_ks, ref, atol=1e-4, rtol=1e-4)

    print("KERNEL_OK")
</pallas_src>

<mosaic_0001>
module attributes {stable_mosaic.version = 11 : i64} {
  func.func @_bert_output_resident_kernel(%arg0: i32, %arg1: memref<8x512xf32, #tpu.memory_space<vmem>>, %arg2: memref<512x128xf32, #tpu.memory_space<vmem>>, %arg3: memref<1x128xf32, #tpu.memory_space<vmem>>, %arg4: memref<8x128xf32, #tpu.memory_space<vmem>>, %arg5: memref<1x128xf32, #tpu.memory_space<vmem>>, %arg6: memref<1x128xf32, #tpu.memory_space<vmem>>, %arg7: memref<8x128xf32, #tpu.memory_space<vmem>>) attributes {dimension_semantics = [#tpu.dimension_semantics<parallel>], iteration_bounds = array<i64: 2>, scalar_prefetch = 0 : i64, scratch_operands = 0 : i64, tpu.core_type = #tpu.core_type<tc>, window_params = [{transform_indices = @transform_0, window_bounds = array<i64: 8, 512>}, {pipeline_mode = #tpu.pipeline_mode<synchronous>, transform_indices = @transform_1, window_bounds = array<i64: 512, 128>}, {pipeline_mode = #tpu.pipeline_mode<synchronous>, transform_indices = @transform_2, window_bounds = array<i64: 1, 128>}, {transform_indices = @transform_3, window_bounds = array<i64: 8, 128>}, {pipeline_mode = #tpu.pipeline_mode<synchronous>, transform_indices = @transform_4, window_bounds = array<i64: 1, 128>}, {pipeline_mode = #tpu.pipeline_mode<synchronous>, transform_indices = @transform_5, window_bounds = array<i64: 1, 128>}, {transform_indices = @transform_6, window_bounds = array<i64: 8, 128>}]} {
    %c0 = arith.constant 0 : index
    %c0_0 = arith.constant 0 : index
    %0 = vector.load %arg1[%c0, %c0_0] : memref<8x512xf32, #tpu.memory_space<vmem>>, vector<8x512xf32>
    %c0_1 = arith.constant 0 : index
    %c0_2 = arith.constant 0 : index
    %1 = vector.load %arg2[%c0_1, %c0_2] : memref<512x128xf32, #tpu.memory_space<vmem>>, vector<512x128xf32>
    %cst = arith.constant dense<0.000000e+00> : vector<8x128xf32>
    %2 = tpu.matmul %0, %1, %cst {dimension_numbers = #tpu.dot_dimension_numbers<[1], [0], [0], [1], [0, 0, 1, 1], [], []>} : vector<8x512xf32>, vector<512x128xf32>, vector<8x128xf32> -> vector<8x128xf32>
    %c0_3 = arith.constant 0 : index
    %c0_4 = arith.constant 0 : index
    %3 = vector.load %arg3[%c0_3, %c0_4] : memref<1x128xf32, #tpu.memory_space<vmem>>, vector<1x128xf32>
    %4 = vector.broadcast %3 : vector<1x128xf32> to vector<8x128xf32>
    %5 = arith.addf %2, %4 : vector<8x128xf32>
    %c0_5 = arith.constant 0 : index
    %c0_6 = arith.constant 0 : index
    %6 = vector.load %arg4[%c0_5, %c0_6] : memref<8x128xf32, #tpu.memory_space<vmem>>, vector<8x128xf32>
    %7 = arith.addf %5, %6 : vector<8x128xf32>
    %cst_7 = arith.constant dense<0.000000e+00> : vector<8xf32>
    %8 = vector.multi_reduction <add>, %7, %cst_7 [1] : vector<8x128xf32> to vector<8xf32>
    %9 = vector.shape_cast %8 : vector<8xf32> to vector<8x1xf32>
    %cst_8 = arith.constant 7.812500e-03 : f32
    %10 = vector.broadcast %cst_8 : f32 to vector<8x1xf32>
    %11 = arith.mulf %9, %10 : vector<8x1xf32>
    %12 = vector.broadcast %11 : vector<8x1xf32> to vector<8x128xf32>
    %13 = arith.subf %7, %12 : vector<8x128xf32>
    %14 = arith.mulf %13, %13 : vector<8x128xf32>
    %cst_9 = arith.constant dense<0.000000e+00> : vector<8xf32>
    %15 = vector.multi_reduction <add>, %14, %cst_9 [1] : vector<8x128xf32> to vector<8xf32>
    %16 = vector.shape_cast %15 : vector<8xf32> to vector<8x1xf32>
    %cst_10 = arith.constant 7.812500e-03 : f32
    %17 = vector.broadcast %cst_10 : f32 to vector<8x1xf32>
    %18 = arith.mulf %16, %17 : vector<8x1xf32>
    %cst_11 = arith.constant 9.99999996E-13 : f32
    %19 = vector.broadcast %cst_11 : f32 to vector<8x1xf32>
    %20 = arith.addf %18, %19 : vector<8x1xf32>
    %21 = math.rsqrt %20 : vector<8x1xf32>
    %22 = vector.broadcast %21 : vector<8x1xf32> to vector<8x128xf32>
    %23 = arith.mulf %13, %22 : vector<8x128xf32>
    %c0_12 = arith.constant 0 : index
    %c0_13 = arith.constant 0 : index
    %24 = vector.load %arg5[%c0_12, %c0_13] : memref<1x128xf32, #tpu.memory_space<vmem>>, vector<1x128xf32>
    %25 = vector.broadcast %24 : vector<1x128xf32> to vector<8x128xf32>
    %26 = arith.mulf %23, %25 : vector<8x128xf32>
    %c0_14 = arith.constant 0 : index
    %c0_15 = arith.constant 0 : index
    %27 = vector.load %arg6[%c0_14, %c0_15] : memref<1x128xf32, #tpu.memory_space<vmem>>, vector<1x128xf32>
    %28 = vector.broadcast %27 : vector<1x128xf32> to vector<8x128xf32>
    %29 = arith.addf %26, %28 : vector<8x128xf32>
    %c0_16 = arith.constant 0 : index
    %c0_17 = arith.constant 0 : index
    %30 = vector.load %arg7[%c0_16, %c0_17] : memref<8x128xf32, #tpu.memory_space<vmem>>, vector<8x128xf32>
    tpu.vector_store %arg7[%c0_16, %c0_17], %29 {strides = array<i32>} : memref<8x128xf32, #tpu.memory_space<vmem>>, vector<8x128xf32>,
    return
  }
  func.func @transform_0(%arg0: i32) -> (i32, i32) {
    %c0_i32 = arith.constant 0 : i32
    %c0_i32_0 = arith.constant 0 : i32
    return %arg0, %c0_i32 : i32, i32
  }
  func.func @transform_1(%arg0: i32) -> (i32, i32) {
    %c0_i32 = arith.constant 0 : i32
    %c0_i32_0 = arith.constant 0 : i32
    %c0_i32_1 = arith.constant 0 : i32
    return %c0_i32, %c0_i32_0 : i32, i32
  }
  func.func @transform_2(%arg0: i32) -> (i32, i32) {
    %c0_i32 = arith.constant 0 : i32
    %c0_i32_0 = arith.constant 0 : i32
    %c0_i32_1 = arith.constant 0 : i32
    return %c0_i32, %c0_i32_0 : i32, i32
  }
  func.func @transform_3(%arg0: i32) -> (i32, i32) {
    %c0_i32 = arith.constant 0 : i32
    %c0_i32_0 = arith.constant 0 : i32
    return %arg0, %c0_i32 : i32, i32
  }
  func.func @transform_4(%arg0: i32) -> (i32, i32) {
    %c0_i32 = arith.constant 0 : i32
    %c0_i32_0 = arith.constant 0 : i32
    %c0_i32_1 = arith.constant 0 : i32
    return %c0_i32, %c0_i32_0 : i32, i32
  }
  func.func @transform_5(%arg0: i32) -> (i32, i32) {
    %c0_i32 = arith.constant 0 : i32
    %c0_i32_0 = arith.constant 0 : i32
    %c0_i32_1 = arith.constant 0 : i32
    return %c0_i32, %c0_i32_0 : i32, i32
  }
  func.func @transform_6(%arg0: i32) -> (i32, i32) {
    %c0_i32 = arith.constant 0 : i32
    %c0_i32_0 = arith.constant 0 : i32
    return %arg0, %c0_i32 : i32, i32
  }
}

module attributes {stable_mosaic.version = 11 : i64} {
  func.func @_bert_output_resident_kernel(%arg0: i32, %arg1: memref<8x512xf32, #tpu.memory_space<vmem>>, %arg2: memref<512x128xf32, #tpu.memory_space<vmem>>, %arg3: memref<1x128xf32, #tpu.memory_space<vmem>>, %arg4: memref<8x128xf32, #tpu.memory_space<vmem>>, %arg5: memref<1x128xf32, #tpu.memory_space<vmem>>, %arg6: memref<1x128xf32, #tpu.memory_space<vmem>>, %arg7: memref<8x128xf32, #tpu.memory_space<vmem>>) attributes {dimension_semantics = [#tpu.dimension_semantics<parallel>], iteration_bounds = array<i64: 2>, scalar_prefetch = 0 : i64, scratch_operands = 0 : i64, tpu.core_type = #tpu.core_type<tc>, window_params = [{transform_indices = @transform_0, window_bounds = array<i64: 8, 512>}, {pipeline_mode = #tpu.pipeline_mode<synchronous>, transform_indices = @transform_1, window_bounds = array<i64: 512, 128>}, {pipeline_mode = #tpu.pipeline_mode<synchronous>, transform_indices = @transform_2, window_bounds = array<i64: 1, 128>}, {transform_indices = @transform_3, window_bounds = array<i64: 8, 128>}, {pipeline_mode = #tpu.pipeline_mode<synchronous>, transform_indices = @transform_4, window_bounds = array<i64: 1, 128>}, {pipeline_mode = #tpu.pipeline_mode<synchronous>, transform_indices = @transform_5, window_bounds = array<i64: 1, 128>}, {transform_indices = @transform_6, window_bounds = array<i64: 8, 128>}]} {
    %c0 = arith.constant 0 : index
    %c0_0 = arith.constant 0 : index
    %0 = vector.load %arg1[%c0, %c0_0] : memref<8x512xf32, #tpu.memory_space<vmem>>, vector<8x512xf32>
    %c0_1 = arith.constant 0 : index
    %c0_2 = arith.constant 0 : index
    %1 = vector.load %arg2[%c0_1, %c0_2] : memref<512x128xf32, #tpu.memory_space<vmem>>, vector<512x128xf32>
    %cst = arith.constant dense<0.000000e+00> : vector<8x128xf32>
    %2 = tpu.matmul %0, %1, %cst {dimension_numbers = #tpu.dot_dimension_numbers<[1], [0], [0], [1], [0, 0, 1, 1], [], []>} : vector<8x512xf32>, vector<512x128xf32>, vector<8x128xf32> -> vector<8x128xf32>
    %c0_3 = arith.constant 0 : index
    %c0_4 = arith.constant 0 : index
    %3 = vector.load %arg3[%c0_3, %c0_4] : memref<1x128xf32, #tpu.memory_space<vmem>>, vector<1x128xf32>
    %4 = vector.broadcast %3 : vector<1x128xf32> to vector<8x128xf32>
    %5 = arith.addf %2, %4 : vector<8x128xf32>
    %c0_5 = arith.constant 0 : index
    %c0_6 = arith.constant 0 : index
    %6 = vector.load %arg4[%c0_5, %c0_6] : memref<8x128xf32, #tpu.memory_space<vmem>>, vector<8x128xf32>
    %7 = arith.addf %5, %6 : vector<8x128xf32>
    %cst_7 = arith.constant dense<0.000000e+00> : vector<8xf32>
    %8 = vector.multi_reduction <add>, %7, %cst_7 [1] : vector<8x128xf32> to vector<8xf32>
    %9 = vector.shape_cast %8 : vector<8xf32> to vector<8x1xf32>
    %cst_8 = arith.constant 7.812500e-03 : f32
    %10 = vector.broadcast %cst_8 : f32 to vector<8x1xf32>
    %11 = arith.mulf %9, %10 : vector<8x1xf32>
    %12 = vector.broadcast %11 : vector<8x1xf32> to vector<8x128xf32>
    %13 = arith.subf %7, %12 : vector<8x128xf32>
    %14 = arith.mulf %13, %13 : vector<8x128xf32>
    %cst_9 = arith.constant dense<0.000000e+00> : vector<8xf32>
    %15 = vector.multi_reduction <add>, %14, %cst_9 [1] : vector<8x128xf32> to vector<8xf32>
    %16 = vector.shape_cast %15 : vector<8xf32> to vector<8x1xf32>
    %cst_10 = arith.constant 7.812500e-03 : f32
    %17 = vector.broadcast %cst_10 : f32 to vector<8x1xf32>
    %18 = arith.mulf %16, %17 : vector<8x1xf32>
    %cst_11 = arith.constant 9.99999996E-13 : f32
    %19 = vector.broadcast %cst_11 : f32 to vector<8x1xf32>
    %20 = arith.addf %18, %19 : vector<8x1xf32>
    %21 = math.rsqrt %20 : vector<8x1xf32>
    %22 = vector.broadcast %21 : vector<8x1xf32> to vector<8x128xf32>
    %23 = arith.mulf %13, %22 : vector<8x128xf32>
    %c0_12 = arith.constant 0 : index
    %c0_13 = arith.constant 0 : index
    %24 = vector.load %arg5[%c0_12, %c0_13] : memref<1x128xf32, #tpu.memory_space<vmem>>, vector<1x128xf32>
    %25 = vector.broadcast %24 : vector<1x128xf32> to vector<8x128xf32>
    %26 = arith.mulf %23, %25 : vector<8x128xf32>
    %c0_14 = arith.constant 0 : index
    %c0_15 = arith.constant 0 : index
    %27 = vector.load %arg6[%c0_14, %c0_15] : memref<1x128xf32, #tpu.memory_space<vmem>>, vector<1x128xf32>
    %28 = vector.broadcast %27 : vector<1x128xf32> to vector<8x128xf32>
    %29 = arith.addf %26, %28 : vector<8x128xf32>
    %c0_16 = arith.constant 0 : index
    %c0_17 = arith.constant 0 : index
    %30 = vector.load %arg7[%c0_16, %c0_17] : memref<8x128xf32, #tpu.memory_space<vmem>>, vector<8x128xf32>
    tpu.vector_store %arg7[%c0_16, %c0_17], %29 {strides = array<i32>} : memref<8x128xf32, #tpu.memory_space<vmem>>, vector<8x128xf32>,
    return
  }
  func.func @transform_0(%arg0: i32) -> (i32, i32) {
    %c0_i32 = arith.constant 0 : i32
    %c0_i32_0 = arith.constant 0 : i32
    return %arg0, %c0_i32 : i32, i32
  }
  func.func @transform_1(%arg0: i32) -> (i32, i32) {
    %c0_i32 = arith.constant 0 : i32
    %c0_i32_0 = arith.constant 0 : i32
    %c0_i32_1 = arith.constant 0 : i32
    return %c0_i32, %c0_i32_0 : i32, i32
  }
  func.func @transform_2(%arg0: i32) -> (i32, i32) {
    %c0_i32 = arith.constant 0 : i32
    %c0_i32_0 = arith.constant 0 : i32
    %c0_i32_1 = arith.constant 0 : i32
    return %c0_i32, %c0_i32_0 : i32, i32
  }
  func.func @transform_3(%arg0: i32) -> (i32, i32) {
    %c0_i32 = arith.constant 0 : i32
    %c0_i32_0 = arith.constant 0 : i32
    return %arg0, %c0_i32 : i32, i32
  }
  func.func @transform_4(%arg0: i32) -> (i32, i32) {
    %c0_i32 = arith.constant 0 : i32
    %c0_i32_0 = arith.constant 0 : i32
    %c0_i32_1 = arith.constant 0 : i32
    return %c0_i32, %c0_i32_0 : i32, i32
  }
  func.func @transform_5(%arg0: i32) -> (i32, i32) {
    %c0_i32 = arith.constant 0 : i32
    %c0_i32_0 = arith.constant 0 : i32
    %c0_i32_1 = arith.constant 0 : i32
    return %c0_i32, %c0_i32_0 : i32, i32
  }
  func.func @transform_6(%arg0: i32) -> (i32, i32) {
    %c0_i32 = arith.constant 0 : i32
    %c0_i32_0 = arith.constant 0 : i32
    return %arg0, %c0_i32 : i32, i32
  }
}

</mosaic_0001>

<llo_original>
// kernel: tpu_custom_call.1
$region0: #{tpu_custom_call.1}
  #allocation0 [shape = 'u32[]', space=smem, size = 0x4, offset = 0x4, fixed_abs, tag = 'smem constant byte address 0x4 - core index']
  #allocation1 [shape = 'u32[144,128]{1,0:T(1,128)}', space=vmem, size = 0x12000, scoped, tag = 'internal scratch']
  %s0 = inlined_call_operand.hbm [shape: f32[16,512], index: 0, kind: input, shape index: {}]
  %s1 = inlined_call_operand.hbm [shape: f32[512,128], index: 1, kind: input, shape index: {}]
  %s2 = inlined_call_operand.vmem [shape: f32[1,128], index: 2, kind: input, shape index: {}]
  %s3 = inlined_call_operand.hbm [shape: f32[16,128], index: 3, kind: input, shape index: {}]
  %s4 = inlined_call_operand.vmem [shape: f32[1,128], index: 4, kind: input, shape index: {}]
  %s5 = inlined_call_operand.vmem [shape: f32[1,128], index: 5, kind: input, shape index: {}]
  %s6 = inlined_call_operand.hbm [shape: f32[16,128], index: 6, kind: output, shape index: {}]
  %s7 = sld [smem:[#allocation0]]
  $region69: #{tpu_custom_call.1} parent=0
    _
  %s9 = ssub.s32 1, %s7
  %s10 = scalar_select 0, %s9, %s7
  $region1: #{tpu_custom_call.1} parent=0
    #allocation2 [shape = 'u8[32768]{0}', space=vmem, size = 0x8000, scoped, tag = 'input window, operand 0']
    #allocation3 [shape = 's32[2]{0}', space=sflag, size = 0x8, scoped, tag = 'scoped memory for tpu_custom_call.1']
    #allocation4 [shape = 's32[2]{0}', space=sflag, size = 0x8, scoped, tag = 'scoped memory for tpu_custom_call.1']
    #allocation5 [shape = 'u8[262144]{0}', space=vmem, size = 0x40000, scoped, tag = 'input window, operand 1, single buffered']
    #allocation6 [shape = 's32[1]{0}', space=sflag, size = 0x4, scoped, tag = 'scoped memory for tpu_custom_call.1']
    #allocation7 [shape = 'u8[8192]{0}', space=vmem, size = 0x2000, scoped, tag = 'input window, operand 3']
    #allocation8 [shape = 'u8[8192]{0}', space=vmem, size = 0x2000, scoped, tag = 'output window, operand 0']
    %11 = vsyncpa [#allocation3], 0
    %s12 = scalar_lea.sflag [#allocation3], 1
    %13 = vsyncpa %s12, 0
    %14 = vsyncpa [#allocation6], 0
    %15 = vsyncpa [#allocation4], 0
    %s16 = scalar_lea.sflag [#allocation4], 1
    %17 = vsyncpa %s16, 0
    loop: start=0, step=1, limit=4
    $region2: #{tpu_custom_call.1} parent=1 // loop_pre_header
      _
    $region3: #{tpu_custom_call.1} parent=1 // loop_header
      %s19 = sphi 0, %s23
      %p20 = scmp.ge.s32.totalorder %s19, 4
      %s29 = sphi 0, %s31
      %s32 = sphi 0, %s29
      %s33 = sphi 0, %s32
      %s49 = sphi 0, %s33
      %s53 = sphi 0, %s53
      %s55 = sphi 0, %s53
      %s56 = sphi 0, %s55
      %s70 = sphi 0, %s56
      %s74 = sphi 0, %s74
      %s76 = sphi 0, %s74
      %s77 = sphi 0, %s76
      %s91 = sphi 0, %s77
      %s97 = sphi 0, %s99
      %s100 = sphi 0, %s97
      %s101 = sphi 0, %s100
      %s117 = sphi 0, %s101
      %s121 = sphi 0, %s121
      %s123 = sphi 0, %s121
      %s124 = sphi 0, %s123
      %s138 = sphi 0, %s124
      %s142 = sphi 0, %s142
      %s144 = sphi 0, %s142
      %s145 = sphi 0, %s144
      %s159 = sphi 0, %s145
      %s165 = sphi 0, %s167
      %s168 = sphi 0, %s165
      %s169 = sphi 0, %s168
      %s185 = sphi 0, %s169
    $region4: #{tpu_custom_call.1} parent=1 // loop_header_branch
      %22 = sbr.rel (%p20) target = $region8
    $region5: #{tpu_custom_call.1} parent=1 // loop_body
      %s24 = ssub.s32 %s19, 1
      %s25 = ssub.s32 %s19, 2
      %s26 = sadd.s32 %s19, 1
      %s27 = ssub.s32 %s19, %s26
      %p28 = scmp.eq.s32.totalorder %s27, 0
      %s30 = sadd.s32 %s29, 1
      %s31 = scalar_select %p28, %s29, %s30
      %p34 = pneg %p28
      %p35 = scmp.eq.s32.totalorder %s19, 1
      %p36 = por %p34, %p35
      %p37 = scmp.ne.s32.totalorder %s29, %s32
      %p38 = scmp.eq.s32.totalorder %s19, 0
      %p39 = por %p37, %p38
      %p40 = scmp.ne.s32.totalorder %s29, %s32
      %p41 = scmp.eq.s32.totalorder %s24, 1
      %p42 = por %p40, %p41
      %p43 = scmp.ne.s32.totalorder %s32, %s33
      %p44 = scmp.eq.s32.totalorder %s24, 0
      %p45 = por %p43, %p44
      %p46 = scmp.ne.s32.totalorder %s32, %s33
      %p47 = scmp.eq.s32.totalorder %s25, 1
      %p48 = por %p46, %p47
      %p50 = scmp.ne.s32.totalorder %s33, %s49
      %p51 = scmp.eq.s32.totalorder %s25, 0
      %p52 = por %p50, %p51
      %s54 = sadd.s32 %s53, 1
      %p57 = scmp.eq.s32.totalorder %s19, 1
      %p58 = scmp.ne.s32.totalorder %s53, %s55
      %p59 = scmp.eq.s32.totalorder %s19, 0
      %p60 = por %p58, %p59
      %p61 = scmp.ne.s32.totalorder %s53, %s55
      %p62 = scmp.eq.s32.totalorder %s24, 1
      %p63 = por %p61, %p62
      %p64 = scmp.ne.s32.totalorder %s55, %s56
      %p65 = scmp.eq.s32.totalorder %s24, 0
      %p66 = por %p64, %p65
      %p67 = scmp.ne.s32.totalorder %s55, %s56
      %p68 = scmp.eq.s32.totalorder %s25, 1
      %p69 = por %p67, %p68
      %p71 = scmp.ne.s32.totalorder %s56, %s70
      %p72 = scmp.eq.s32.totalorder %s25, 0
      %p73 = por %p71, %p72
      %s75 = sadd.s32 %s74, 1
      %p78 = scmp.eq.s32.totalorder %s19, 1
      %p79 = scmp.ne.s32.totalorder %s74, %s76
      %p80 = scmp.eq.s32.totalorder %s19, 0
      %p81 = por %p79, %p80
      %p82 = scmp.ne.s32.totalorder %s74, %s76
      %p83 = scmp.eq.s32.totalorder %s24, 1
      %p84 = por %p82, %p83
      %p85 = scmp.ne.s32.totalorder %s76, %s77
      %p86 = scmp.eq.s32.totalorder %s24, 0
      %p87 = por %p85, %p86
      %p88 = scmp.ne.s32.totalorder %s76, %s77
      %p89 = scmp.eq.s32.totalorder %s25, 1
      %p90 = por %p88, %p89
      %p92 = scmp.ne.s32.totalorder %s77, %s91
      %p93 = scmp.eq.s32.totalorder %s25, 0
      %p94 = por %p92, %p93
      %s95 = ssub.s32 %s19, %s26
      %p96 = scmp.eq.s32.totalorder %s95, 0
      %s98 = sadd.s32 %s97, 1
      %s99 = scalar_select %p96, %s97, %s98
      %p102 = pneg %p96
      %p103 = scmp.eq.s32.totalorder %s19, 1
      %p104 = por %p102, %p103
      %p105 = scmp.ne.s32.totalorder %s97, %s100
      %p106 = scmp.eq.s32.totalorder %s19, 0
      %p107 = por %p105, %p106
      %p108 = scmp.ne.s32.totalorder %s97, %s100
      %p109 = scmp.eq.s32.totalorder %s24, 1
      %p110 = por %p108, %p109
      %p111 = scmp.ne.s32.totalorder %s100, %s101
      %p112 = scmp.eq.s32.totalorder %s24, 0
      %p113 = por %p111, %p112
      %p114 = scmp.ne.s32.totalorder %s100, %s101
      %p115 = scmp.eq.s32.totalorder %s25, 1
      %p116 = por %p114, %p115
      %p118 = scmp.ne.s32.totalorder %s101, %s117
      %p119 = scmp.eq.s32.totalorder %s25, 0
      %p120 = por %p118, %p119
      %s122 = sadd.s32 %s121, 1
      %p125 = scmp.eq.s32.totalorder %s19, 1
      %p126 = scmp.ne.s32.totalorder %s121, %s123
      %p127 = scmp.eq.s32.totalorder %s19, 0
      %p128 = por %p126, %p127
      %p129 = scmp.ne.s32.totalorder %s121, %s123
      %p130 = scmp.eq.s32.totalorder %s24, 1
      %p131 = por %p129, %p130
      %p132 = scmp.ne.s32.totalorder %s123, %s124
      %p133 = scmp.eq.s32.totalorder %s24, 0
      %p134 = por %p132, %p133
      %p135 = scmp.ne.s32.totalorder %s123, %s124
      %p136 = scmp.eq.s32.totalorder %s25, 1
      %p137 = por %p135, %p136
      %p139 = scmp.ne.s32.totalorder %s124, %s138
      %p140 = scmp.eq.s32.totalorder %s25, 0
      %p141 = por %p139, %p140
      %s143 = sadd.s32 %s142, 1
      %p146 = scmp.eq.s32.totalorder %s19, 1
      %p147 = scmp.ne.s32.totalorder %s142, %s144
      %p148 = scmp.eq.s32.totalorder %s19, 0
      %p149 = por %p147, %p148
      %p150 = scmp.ne.s32.totalorder %s142, %s144
      %p151 = scmp.eq.s32.totalorder %s24, 1
      %p152 = por %p150, %p151
      %p153 = scmp.ne.s32.totalorder %s144, %s145
      %p154 = scmp.eq.s32.totalorder %s24, 0
      %p155 = por %p153, %p154
      %p156 = scmp.ne.s32.totalorder %s144, %s145
      %p157 = scmp.eq.s32.totalorder %s25, 1
      %p158 = por %p156, %p157
      %p160 = scmp.ne.s32.totalorder %s145, %s159
      %p161 = scmp.eq.s32.totalorder %s25, 0
      %p162 = por %p160, %p161
      %s163 = ssub.s32 %s19, %s26
      %p164 = scmp.eq.s32.totalorder %s163, 0
      %s166 = sadd.s32 %s165, 1
      %s167 = scalar_select %p164, %s165, %s166
      %p170 = pneg %p164
      %p171 = scmp.eq.s32.totalorder %s19, 1
      %p172 = por %p170, %p171
      %p173 = scmp.ne.s32.totalorder %s165, %s168
      %p174 = scmp.eq.s32.totalorder %s19, 0
      %p175 = por %p173, %p174
      %p176 = scmp.ne.s32.totalorder %s165, %s168
      %p177 = scmp.eq.s32.totalorder %s24, 1
      %p178 = por %p176, %p177
      %p179 = scmp.ne.s32.totalorder %s168, %s169
      %p180 = scmp.eq.s32.totalorder %s24, 0
      %p181 = por %p179, %p180
      %p182 = scmp.ne.s32.totalorder %s168, %s169
      %p183 = scmp.eq.s32.totalorder %s25, 1
      %p184 = por %p182, %p183
      %p186 = scmp.ne.s32.totalorder %s169, %s185
      %p187 = scmp.eq.s32.totalorder %s25, 0
      %p188 = por %p186, %p187
      %p189 = scmp.le.s32.totalorder 1, %s19
      %p190 = scmp.lt.s32.totalorder %s19, 3
      %p191 = pnand %p189, %p190
      %p192 = pneg %p191
      // Predicated region
      $region9: #{tpu_custom_call.1} parent=5 // pred_check
        _
      $region10: #{tpu_custom_call.1} parent=5 // pred_check_branch
        %194 = sbr.rel (%p191) target = $region12
      $region11: #{tpu_custom_call.1} parent=5 // pred_region
        %s195 = ssub.s32 %s19, 1
        // Predicated region
        $region13: #{tpu_custom_call.1} parent=11 // pred_check
          %p196 = pneg %p66
        $region14: #{tpu_custom_call.1} parent=11 // pred_check_branch
          %198 = sbr.rel (%p196) target = $region16
        $region15: #{tpu_custom_call.1} parent=11 // pred_region
          %s200 = ssub.s32 8192, 8192
          %201 = vsyncadd [#allocation6], %s200
          %s202 = sshll.u32 [#allocation5], 4
          %s203 = int_to_ptr.vmem [resolvable:$true] %s202
          %208 = dma.hbm_to_vmem [thread:$0]  %s1, 8192, %s203, [#allocation6], 128, 128, 8
        $region16: #{tpu_custom_call.1} parent=11 // pred_fallthru
          _
        // Predicated region
        $region17: #{tpu_custom_call.1} parent=11 // pred_check
          %p209 = pneg %p87
        $region18: #{tpu_custom_call.1} parent=11 // pred_check_branch
          %211 = sbr.rel (%p209) target = $region20
        $region19: #{tpu_custom_call.1} parent=11 // pred_region
          _
        $region20: #{tpu_custom_call.1} parent=11 // pred_fallthru
          _
        // Predicated region
        $region21: #{tpu_custom_call.1} parent=11 // pred_check
          %p212 = pneg %p134
        $region22: #{tpu_custom_call.1} parent=11 // pred_check_branch
          %214 = sbr.rel (%p212) target = $region24
        $region23: #{tpu_custom_call.1} parent=11 // pred_region
          _
        $region24: #{tpu_custom_call.1} parent=11 // pred_fallthru
          _
        // Predicated region
        $region25: #{tpu_custom_call.1} parent=11 // pred_check
          %p215 = pneg %p155
        $region26: #{tpu_custom_call.1} parent=11 // pred_check_branch
          %217 = sbr.rel (%p215) target = $region28
        $region27: #{tpu_custom_call.1} parent=11 // pred_region
          _
        $region28: #{tpu_custom_call.1} parent=11 // pred_fallthru
          _
      $region12: #{tpu_custom_call.1} parent=5 // pred_fallthru
        _
      %p218 = scmp.lt.s32.totalorder %s19, 2
      // Predicated region
      $region29: #{tpu_custom_call.1} parent=5 // pred_check
        %p219 = pneg %p218
      $region30: #{tpu_custom_call.1} parent=5 // pred_check_branch
        %221 = sbr.rel (%p219) target = $region32
      $region31: #{tpu_custom_call.1} parent=5 // pred_region
        // Predicated region
        $region33: #{tpu_custom_call.1} parent=31 // pred_check
          %p222 = pneg %p39
        $region34: #{tpu_custom_call.1} parent=31 // pred_check_branch
          %224 = sbr.rel (%p222) target = $region36
        $region35: #{tpu_custom_call.1} parent=31 // pred_region
          %s225 = sand.u32 %s19, 1
          %s226 = scalar_lea.sflag [#allocation3], %s225
          %s227 = sand.u32 %s29, 1
          %s228 = smul.addr %s227, 32
          %s229 = scalar_lea.vmem [#allocation2], %s228
          %s231 = ssub.s32 512, 512
          %232 = vsyncadd %s226, %s231
          %s233 = smul.addr %s19, 4
          %s234 = smul.addr %s233, 128
          %s235 = scalar_lea.hbm %s0, %s234
          %s237 = sshll.u32 %s229, 4
          %s238 = int_to_ptr.vmem [resolvable:$true] %s237
          %240 = dma.hbm_to_vmem [thread:$0]  %s235, 512, %s238, %s226
        $region36: #{tpu_custom_call.1} parent=31 // pred_fallthru
          _
        // Predicated region
        $region37: #{tpu_custom_call.1} parent=31 // pred_check
          %p241 = pneg %p107
        $region38: #{tpu_custom_call.1} parent=31 // pred_check_branch
          %243 = sbr.rel (%p241) target = $region40
        $region39: #{tpu_custom_call.1} parent=31 // pred_region
          %s244 = sand.u32 %s19, 1
          %s245 = scalar_lea.sflag [#allocation3], %s244
          %s246 = sand.u32 %s97, 1
          %s247 = smul.addr %s246, 8
          %s248 = scalar_lea.vmem [#allocation7], %s247
          %s250 = ssub.s32 128, 128
          %251 = vsyncadd %s245, %s250
          %s252 = smul.addr %s19, 128
          %s253 = scalar_lea.hbm %s3, %s252
          %s255 = sshll.u32 %s248, 4
          %s256 = int_to_ptr.vmem [resolvable:$true] %s255
          %258 = dma.hbm_to_vmem [thread:$0]  %s253, 128, %s256, %s245
        $region40: #{tpu_custom_call.1} parent=31 // pred_fallthru
          _
      $region32: #{tpu_custom_call.1} parent=5 // pred_fallthru
        _
      %p259 = scmp.le.s32.totalorder 1, %s19
      %p260 = scmp.lt.s32.totalorder %s19, 3
      %p261 = pnand %p259, %p260
      %p262 = pneg %p261
      // Predicated region
      $region41: #{tpu_custom_call.1} parent=5 // pred_check
        _
      $region42: #{tpu_custom_call.1} parent=5 // pred_check_branch
        %264 = sbr.rel (%p261) target = $region44
      $region43: #{tpu_custom_call.1} parent=5 // pred_region
        %s265 = ssub.s32 %s19, 1
        %s266 = sand.u32 %s24, 1
        %s267 = scalar_lea.sflag [#allocation3], %s266
        %s268 = sand.u32 %s32, 1
        %s269 = smul.addr %s268, 32
        %s270 = scalar_lea.vmem [#allocation2], %s269
        // Predicated region
        $region45: #{tpu_custom_call.1} parent=43 // pred_check
          %p271 = pneg %p45
        $region46: #{tpu_custom_call.1} parent=43 // pred_check_branch
          %273 = sbr.rel (%p271) target = $region48
        $region47: #{tpu_custom_call.1} parent=43 // pred_region
          %274 = dma.done %s267, 512
        $region48: #{tpu_custom_call.1} parent=43 // pred_fallthru
          _
        // Predicated region
        $region49: #{tpu_custom_call.1} parent=43 // pred_check
          %p275 = pneg %p66
        $region50: #{tpu_custom_call.1} parent=43 // pred_check_branch
          %277 = sbr.rel (%p275) target = $region52
        $region51: #{tpu_custom_call.1} parent=43 // pred_region
          %278 = dma.done [#allocation6], 8192
        $region52: #{tpu_custom_call.1} parent=43 // pred_fallthru
          _
        %s279 = sand.u32 %s24, 1
        %s280 = scalar_lea.sflag [#allocation3], %s279
        %s281 = sand.u32 %s100, 1
        %s282 = smul.addr %s281, 8
        %s283 = scalar_lea.vmem [#allocation7], %s282
        // Predicated region
        $region53: #{tpu_custom_call.1} parent=43 // pred_check
          %p284 = pneg %p113
        $region54: #{tpu_custom_call.1} parent=43 // pred_check_branch
          %286 = sbr.rel (%p284) target = $region56
        $region55: #{tpu_custom_call.1} parent=43 // pred_region
          %287 = dma.done %s280, 128
        $region56: #{tpu_custom_call.1} parent=43 // pred_fallthru
          _
        %s288 = sand.u32 %s24, 1
        %s289 = scalar_lea.sflag [#allocation3], %s288
        %s290 = sand.u32 %s32, 1
        %s291 = smul.addr %s290, 32
        %s292 = scalar_lea.vmem [#allocation2], %s291
        %p293 = pneg %p45
        %p294 = pneg %p42
        %p295 = pneg %p66
        %p296 = pneg %p63
        %p297 = pneg %p87
        %p298 = pneg %p84
        %s299 = sand.u32 %s24, 1
        %s300 = scalar_lea.sflag [#allocation3], %s299
        %s301 = sand.u32 %s100, 1
        %s302 = smul.addr %s301, 8
        %s303 = scalar_lea.vmem [#allocation7], %s302
        %p304 = pneg %p113
        %p305 = pneg %p110
        %p306 = pneg %p134
        %p307 = pneg %p131
        %p308 = pneg %p155
        %p309 = pneg %p152
        %p310 = pneg %p181
        %p311 = pneg %p178
        %s312 = sand.u32 %s168, 1
        %s313 = scalar_lea.sflag [#allocation4], %s312
        %s314 = sand.u32 %s168, 1
        %s315 = smul.addr %s314, 8
        %s316 = scalar_lea.vmem [#allocation8], %s315
        %v317 = vld [vmem:[%s270] sm:$0xff]
        %v318 = vld [vmem:[%s270 + $0x8] sm:$0xff]
        %v319 = vld [vmem:[%s270 + $0x10] sm:$0xff]
        %v320 = vld [vmem:[%s270 + $0x18] sm:$0xff]
        %v321 = vld [vmem:[#allocation5] sm:$0xff]
        %v322 = vld [vmem:[#allocation5 + $0x8] sm:$0xff]
        %v323 = vld [vmem:[#allocation5 + $0x10] sm:$0xff]
        %v324 = vld [vmem:[#allocation5 + $0x18] sm:$0xff]
        %v325 = vld [vmem:[#allocation5 + $0x20] sm:$0xff]
        %v326 = vld [vmem:[#allocation5 + $0x28] sm:$0xff]
        %v327 = vld [vmem:[#allocation5 + $0x30] sm:$0xff]
        %v328 = vld [vmem:[#allocation5 + $0x38] sm:$0xff]
        %v329 = vld [vmem:[#allocation5 + $0x40] sm:$0xff]
        %v330 = vld [vmem:[#allocation5 + $0x48] sm:$0xff]
        %v331 = vld [vmem:[#allocation5 + $0x50] sm:$0xff]
        %v332 = vld [vmem:[#allocation5 + $0x58] sm:$0xff]
        %v333 = vld [vmem:[#allocation5 + $0x60] sm:$0xff]
        %v334 = vld [vmem:[#allocation5 + $0x68] sm:$0xff]
        %v335 = vld [vmem:[#allocation5 + $0x70] sm:$0xff]
        %v336 = vld [vmem:[#allocation5 + $0x78] sm:$0xff]
        %v337 = vld [vmem:[#allocation5 + $0x80] sm:$0xff]
        %v338 = vld [vmem:[#allocation5 + $0x88] sm:$0xff]
        %v339 = vld [vmem:[#allocation5 + $0x90] sm:$0xff]
        %v340 = vld [vmem:[#allocation5 + $0x98] sm:$0xff]
        %v341 = vld [vmem:[#allocation5 + $0xa0] sm:$0xff]
        %v342 = vld [vmem:[#allocation5 + $0xa8] sm:$0xff]
        %v343 = vld [vmem:[#allocation5 + $0xb0] sm:$0xff]
        %v344 = vld [vmem:[#allocation5 + $0xb8] sm:$0xff]
        %v345 = vld [vmem:[#allocation5 + $0xc0] sm:$0xff]
        %v346 = vld [vmem:[#allocation5 + $0xc8] sm:$0xff]
        %v347 = vld [vmem:[#allocation5 + $0xd0] sm:$0xff]
        %v348 = vld [vmem:[#allocation5 + $0xd8] sm:$0xff]
        %v349 = vld [vmem:[#allocation5 + $0xe0] sm:$0xff]
        %v350 = vld [vmem:[#allocation5 + $0xe8] sm:$0xff]
        %v351 = vld [vmem:[#allocation5 + $0xf0] sm:$0xff]
        %v352 = vld [vmem:[#allocation5 + $0xf8] sm:$0xff]
        %v353 = vld [vmem:[#allocation5 + $0x100] sm:$0xff]
        %v354 = vld [vmem:[#allocation5 + $0x108] sm:$0xff]
        %v355 = vld [vmem:[#allocation5 + $0x110] sm:$0xff]
        %v356 = vld [vmem:[#allocation5 + $0x118] sm:$0xff]
        %v357 = vld [vmem:[#allocation5 + $0x120] sm:$0xff]
        %v358 = vld [vmem:[#allocation5 + $0x128] sm:$0xff]
        %v359 = vld [vmem:[#allocation5 + $0x130] sm:$0xff]
        %v360 = vld [vmem:[#allocation5 + $0x138] sm:$0xff]
        %v361 = vld [vmem:[#allocation5 + $0x140] sm:$0xff]
        %v362 = vld [vmem:[#allocation5 + $0x148] sm:$0xff]
        %v363 = vld [vmem:[#allocation5 + $0x150] sm:$0xff]
        %v364 = vld [vmem:[#allocation5 + $0x158] sm:$0xff]
        %v365 = vld [vmem:[#allocation5 + $0x160] sm:$0xff]
        %v366 = vld [vmem:[#allocation5 + $0x168] sm:$0xff]
        %v367 = vld [vmem:[#allocation5 + $0x170] sm:$0xff]
        %v368 = vld [vmem:[#allocation5 + $0x178] sm:$0xff]
        %v369 = vld [vmem:[#allocation5 + $0x180] sm:$0xff]
        %v370 = vld [vmem:[#allocation5 + $0x188] sm:$0xff]
        %v371 = vld [vmem:[#allocation5 + $0x190] sm:$0xff]
        %v372 = vld [vmem:[#allocation5 + $0x198] sm:$0xff]
        %v373 = vld [vmem:[#allocation5 + $0x1a0] sm:$0xff]
        %v374 = vld [vmem:[#allocation5 + $0x1a8] sm:$0xff]
        %v375 = vld [vmem:[#allocation5 + $0x1b0] sm:$0xff]
        %v376 = vld [vmem:[#allocation5 + $0x1b8] sm:$0xff]
        %v377 = vld [vmem:[#allocation5 + $0x1c0] sm:$0xff]
        %v378 = vld [vmem:[#allocation5 + $0x1c8] sm:$0xff]
        %v379 = vld [vmem:[#allocation5 + $0x1d0] sm:$0xff]
        %v380 = vld [vmem:[#allocation5 + $0x1d8] sm:$0xff]
        %v381 = vld [vmem:[#allocation5 + $0x1e0] sm:$0xff]
        %v382 = vld [vmem:[#allocation5 + $0x1e8] sm:$0xff]
        %v383 = vld [vmem:[#allocation5 + $0x1f0] sm:$0xff]
        %v384 = vld [vmem:[#allocation5 + $0x1f8] sm:$0xff]
        %v385 = vld [vmem:[%s2] sm:$0x1]
        %v387 = vlaneseq
        %v388 = vshrl.u32 %v387, 7
        %v389 = vsub.s32 0, %v388
        %v390 = vrot.slane %v385, %v389
        %392 = vmatprep.subr.mxu0 0.0
        %393 = vmatpush1.msra.mxu0 %v321
        %394 = vmatprep.subr.mxu0 0.0
        %395 = vmatpush1.msra.mxu0 %v322
        %396 = vmatprep.subr.mxu0 0.0
        %397 = vmatpush1.msra.mxu0 %v323
        %398 = vmatprep.subr.mxu0 0.0
        %399 = vmatpush1.msra.mxu0 %v324
        %400 = vmatprep.subr.mxu0 0.0
        %401 = vmatpush1.msra.mxu0 %v325
        %402 = vmatprep.subr.mxu0 0.0
        %403 = vmatpush1.msra.mxu0 %v326
        %404 = vmatprep.subr.mxu0 0.0
        %405 = vmatpush1.msra.mxu0 %v327
        %406 = vmatprep.subr.mxu0 0.0
        %407 = vmatpush1.msra.mxu0 %v328
        %408 = vmatprep.subr.mxu0 0.0
        %409 = vmatpush1.msra.mxu0 %v329
        %410 = vmatprep.subr.mxu0 0.0
        %411 = vmatpush1.msra.mxu0 %v330
        %412 = vmatprep.subr.mxu0 0.0
        %413 = vmatpush1.msra.mxu0 %v331
        %414 = vmatprep.subr.mxu0 0.0
        %415 = vmatpush1.msra.mxu0 %v332
        %416 = vmatprep.subr.mxu0 0.0
        %417 = vmatpush1.msra.mxu0 %v333
        %418 = vmatprep.subr.mxu0 0.0
        %419 = vmatpush1.msra.mxu0 %v334
        %420 = vmatprep.subr.mxu0 0.0
        %421 = vmatpush1.msra.mxu0 %v335
        %422 = vmatprep.subr.mxu0 0.0
        %423 = vmatpush1.msra.mxu0 %v336
        %424 = vmatprep.subr.mxu0 0.0
        %425 = vmatpush1.msra.mxu0 %v337
        %426 = vmatprep.subr.mxu0 0.0
        %427 = vmatpush1.msra.mxu0 %v338
        %428 = vmatprep.subr.mxu0 0.0
        %429 = vmatpush1.msra.mxu0 %v339
        %430 = vmatprep.subr.mxu0 0.0
        %431 = vmatpush1.msra.mxu0 %v340
        %432 = vmatprep.subr.mxu0 0.0
        %433 = vmatpush1.msra.mxu0 %v341
        %434 = vmatprep.subr.mxu0 0.0
        %435 = vmatpush1.msra.mxu0 %v342
        %436 = vmatprep.subr.mxu0 0.0
        %437 = vmatpush1.msra.mxu0 %v343
        %438 = vmatprep.subr.mxu0 0.0
        %439 = vmatpush1.msra.mxu0 %v344
        %440 = vmatprep.subr.mxu0 0.0
        %441 = vmatpush1.msra.mxu0 %v345
        %442 = vmatprep.subr.mxu0 0.0
        %443 = vmatpush1.msra.mxu0 %v346
        %444 = vmatprep.subr.mxu0 0.0
        %445 = vmatpush1.msra.mxu0 %v347
        %446 = vmatprep.subr.mxu0 0.0
        %447 = vmatpush1.msra.mxu0 %v348
        %448 = vmatprep.subr.mxu0 0.0
        %449 = vmatpush1.msra.mxu0 %v349
        %450 = vmatprep.subr.mxu0 0.0
        %451 = vmatpush1.msra.mxu0 %v350
        %452 = vmatprep.subr.mxu0 0.0
        %453 = vmatpush1.msra.mxu0 %v351
        %454 = vmatprep.subr.mxu0 0.0
        %455 = vmatpush1.msra.mxu0 %v352
        %456 = vmatprep.mubr.f32.mxu0 %v318
        %457 = vmatmul.mubr.f32.gmra.mrb[0].mxu0 %v317
        %v458 = vpop.f32.mrb[0].mxu0
        %v459 = vadd.f32 %v390, %v458
        %v460 = vpop.f32.mrb[0].mxu0
        %461 = vdwg.mxu0
        %462 = vmatprep.subr.mxu0 0.0
        %463 = vmatpush1.msra.mxu0 %v353
        %464 = vmatprep.subr.mxu0 0.0
        %465 = vmatpush1.msra.mxu0 %v354
        %466 = vmatprep.subr.mxu0 0.0
        %467 = vmatpush1.msra.mxu0 %v355
        %468 = vmatprep.subr.mxu0 0.0
        %469 = vmatpush1.msra.mxu0 %v356
        %470 = vmatprep.subr.mxu0 0.0
        %471 = vmatpush1.msra.mxu0 %v357
        %472 = vmatprep.subr.mxu0 0.0
        %473 = vmatpush1.msra.mxu0 %v358
        %474 = vmatprep.subr.mxu0 0.0
        %475 = vmatpush1.msra.mxu0 %v359
        %476 = vmatprep.subr.mxu0 0.0
        %477 = vmatpush1.msra.mxu0 %v360
        %478 = vmatprep.subr.mxu0 0.0
        %479 = vmatpush1.msra.mxu0 %v361
        %480 = vmatprep.subr.mxu0 0.0
        %481 = vmatpush1.msra.mxu0 %v362
        %482 = vmatprep.subr.mxu0 0.0
        %483 = vmatpush1.msra.mxu0 %v363
        %484 = vmatprep.subr.mxu0 0.0
        %485 = vmatpush1.msra.mxu0 %v364
        %486 = vmatprep.subr.mxu0 0.0
        %487 = vmatpush1.msra.mxu0 %v365
        %488 = vmatprep.subr.mxu0 0.0
        %489 = vmatpush1.msra.mxu0 %v366
        %490 = vmatprep.subr.mxu0 0.0
        %491 = vmatpush1.msra.mxu0 %v367
        %492 = vmatprep.subr.mxu0 0.0
        %493 = vmatpush1.msra.mxu0 %v368
        %494 = vmatprep.subr.mxu0 0.0
        %495 = vmatpush1.msra.mxu0 %v369
        %496 = vmatprep.subr.mxu0 0.0
        %497 = vmatpush1.msra.mxu0 %v370
        %498 = vmatprep.subr.mxu0 0.0
        %499 = vmatpush1.msra.mxu0 %v371
        %500 = vmatprep.subr.mxu0 0.0
        %501 = vmatpush1.msra.mxu0 %v372
        %502 = vmatprep.subr.mxu0 0.0
        %503 = vmatpush1.msra.mxu0 %v373
        %504 = vmatprep.subr.mxu0 0.0
        %505 = vmatpush1.msra.mxu0 %v374
        %506 = vmatprep.subr.mxu0 0.0
        %507 = vmatpush1.msra.mxu0 %v375
        %508 = vmatprep.subr.mxu0 0.0
        %509 = vmatpush1.msra.mxu0 %v376
        %510 = vmatprep.subr.mxu0 0.0
        %511 = vmatpush1.msra.mxu0 %v377
        %512 = vmatprep.subr.mxu0 0.0
        %513 = vmatpush1.msra.mxu0 %v378
        %514 = vmatprep.subr.mxu0 0.0
        %515 = vmatpush1.msra.mxu0 %v379
        %516 = vmatprep.subr.mxu0 0.0
        %517 = vmatpush1.msra.mxu0 %v380
        %518 = vmatprep.subr.mxu0 0.0
        %519 = vmatpush1.msra.mxu0 %v381
        %520 = vmatprep.subr.mxu0 0.0
        %521 = vmatpush1.msra.mxu0 %v382
        %522 = vmatprep.subr.mxu0 0.0
        %523 = vmatpush1.msra.mxu0 %v383
        %524 = vmatprep.subr.mxu0 0.0
        %525 = vmatpush1.msra.mxu0 %v384
        %526 = vmatprep.mubr.f32.mxu0 %v320
        %527 = vmatmul.mubr.f32.gmra.mrb[0].mxu0 %v319
        %v528 = vpop.f32.mrb[0].mxu0
        %v529 = vadd.f32 %v459, %v528
        %v530 = vpop.f32.mrb[0].mxu0
        %531 = vdwg.mxu0
        %v532 = vld [vmem:[%s283] sm:$0xff]
        %v533 = vadd.f32 %v529, %v532
        %534 = vadd.xlane.f32.xlu0 %v533
        %v535 = vpop.xlane.xlu0 %534
        %v536 = vmul.f32 %v535, 0.0078125
        %v537 = vsub.f32 %v533, %v536
        %v538 = vmul.f32 %v537, %v537
        %539 = vadd.xlane.f32.xlu0 %v538
        %v540 = vpop.xlane.xlu0 %539
        %v541 = vmul.f32 %v540, 0.0078125
        %v542 = vadd.f32 %v541, 1e-12
        %v543 = vrsqrt.pop %v542
        %v544 = vmul.f32 %v537, %v543
        %v545 = vld [vmem:[%s4] sm:$0x1]
        %v547 = vlaneseq
        %v548 = vshrl.u32 %v547, 7
        %v549 = vsub.s32 0, %v548
        %v550 = vrot.slane %v545, %v549
        %v552 = vmul.f32 %v544, %v550
        %v553 = vld [vmem:[%s5] sm:$0x1]
        %v555 = vlaneseq
        %v556 = vshrl.u32 %v555, 7
        %v557 = vsub.s32 0, %v556
        %v558 = vrot.slane %v553, %v557
        %v560 = vadd.f32 %v552, %v558
        %561 = vst [vmem:[%s316] sm:$0xff] %v560
        %s562 = sand.u32 %s168, 1
        %s563 = scalar_lea.sflag [#allocation4], %s562
        %s564 = sand.u32 %s168, 1
        %s565 = smul.addr %s564, 8
        %s566 = scalar_lea.vmem [#allocation8], %s565
        // Predicated region
        $region57: #{tpu_custom_call.1} parent=43 // pred_check
          %p567 = pneg %p178
        $region58: #{tpu_custom_call.1} parent=43 // pred_check_branch
          %569 = sbr.rel (%p567) target = $region60
        $region59: #{tpu_custom_call.1} parent=43 // pred_region
          %s571 = ssub.s32 128, 128
          %572 = vsyncadd %s563, %s571
          %s573 = smul.addr %s24, 128
          %s574 = scalar_lea.hbm %s6, %s573
          %s576 = sshll.u32 %s566, 4
          %s577 = int_to_ptr.vmem [resolvable:$true] %s576
          %579 = dma.vmem_to_hbm [thread:$0]  %s577, 128, %s574, %s563
        $region60: #{tpu_custom_call.1} parent=43 // pred_fallthru
          _
      $region44: #{tpu_custom_call.1} parent=5 // pred_fallthru
        _
      %p580 = scmp.le.s32.totalorder 2, %s19
      // Predicated region
      $region61: #{tpu_custom_call.1} parent=5 // pred_check
        %p581 = pneg %p580
      $region62: #{tpu_custom_call.1} parent=5 // pred_check_branch
        %583 = sbr.rel (%p581) target = $region64
      $region63: #{tpu_custom_call.1} parent=5 // pred_region
        %s584 = ssub.s32 %s19, 2
        // Predicated region
        $region65: #{tpu_custom_call.1} parent=63 // pred_check
          %p585 = pneg %p184
        $region66: #{tpu_custom_call.1} parent=63 // pred_check_branch
          %587 = sbr.rel (%p585) target = $region68
        $region67: #{tpu_custom_call.1} parent=63 // pred_region
          %s588 = sand.u32 %s169, 1
          %s589 = scalar_lea.sflag [#allocation4], %s588
          %s590 = sand.u32 %s169, 1
          %s591 = smul.addr %s590, 8
          %s592 = scalar_lea.vmem [#allocation8], %s591
          %593 = dma.done %s589, 128
        $region68: #{tpu_custom_call.1} parent=63 // pred_fallthru
          _
      $region64: #{tpu_custom_call.1} parent=5 // pred_fallthru
        _
    $region6: #{tpu_custom_call.1} parent=1 // loop_footer
      %s23 = sadd.s32 1, %s19
    $region7: #{tpu_custom_call.1} parent=1 // loop_footer_branch
      %18 = sbr.rel target = $region3
    $region8: #{tpu_custom_call.1} parent=1 // loop_exit
      _
    %594 = vsyncpa [#allocation3], 1
    %s595 = scalar_lea.sflag [#allocation3], 1
    %596 = vsyncpa %s595, 1
    %597 = vsyncpa [#allocation6], 1
    %598 = vsyncpa [#allocation4], 1
    %s599 = scalar_lea.sflag [#allocation4], 1
    %600 = vsyncpa %s599, 1

// kernel: tpu_custom_call.1
$region0: #{tpu_custom_call.1}
  #allocation0 [shape = 'u32[]', space=smem, size = 0x4, offset = 0x4, fixed_abs, tag = 'smem constant byte address 0x4 - core index']
  #allocation1 [shape = 'u32[144,128]{1,0:T(1,128)}', space=vmem, size = 0x12000, scoped, tag = 'internal scratch']
  %s0 = inlined_call_operand.hbm [shape: f32[16,512], index: 0, kind: input, shape index: {}]
  %s1 = inlined_call_operand.hbm [shape: f32[512,128], index: 1, kind: input, shape index: {}]
  %s2 = inlined_call_operand.vmem [shape: f32[1,128], index: 2, kind: input, shape index: {}]
  %s3 = inlined_call_operand.hbm [shape: f32[16,128], index: 3, kind: input, shape index: {}]
  %s4 = inlined_call_operand.vmem [shape: f32[1,128], index: 4, kind: input, shape index: {}]
  %s5 = inlined_call_operand.vmem [shape: f32[1,128], index: 5, kind: input, shape index: {}]
  %s6 = inlined_call_operand.hbm [shape: f32[16,128], index: 6, kind: output, shape index: {}]
  %s7 = sld [smem:[#allocation0]]
  $region69: #{tpu_custom_call.1} parent=0
    _
  %s9 = ssub.s32 1, %s7
  %s10 = scalar_select 0, %s9, %s7
  $region1: #{tpu_custom_call.1} parent=0
    #allocation2 [shape = 'u8[32768]{0}', space=vmem, size = 0x8000, scoped, tag = 'input window, operand 0']
    #allocation3 [shape = 's32[2]{0}', space=sflag, size = 0x8, scoped, tag = 'scoped memory for tpu_custom_call.1']
    #allocation4 [shape = 's32[2]{0}', space=sflag, size = 0x8, scoped, tag = 'scoped memory for tpu_custom_call.1']
    #allocation5 [shape = 'u8[262144]{0}', space=vmem, size = 0x40000, scoped, tag = 'input window, operand 1, single buffered']
    #allocation6 [shape = 's32[1]{0}', space=sflag, size = 0x4, scoped, tag = 'scoped memory for tpu_custom_call.1']
    #allocation7 [shape = 'u8[8192]{0}', space=vmem, size = 0x2000, scoped, tag = 'input window, operand 3']
    #allocation8 [shape = 'u8[8192]{0}', space=vmem, size = 0x2000, scoped, tag = 'output window, operand 0']
    %11 = vsyncpa [#allocation3], 0
    %s12 = scalar_lea.sflag [#allocation3], 1
    %13 = vsyncpa %s12, 0
    %14 = vsyncpa [#allocation6], 0
    %15 = vsyncpa [#allocation4], 0
    %s16 = scalar_lea.sflag [#allocation4], 1
    %17 = vsyncpa %s16, 0
    loop: start=0, step=1, limit=4
    $region2: #{tpu_custom_call.1} parent=1 // loop_pre_header
      _
    $region3: #{tpu_custom_call.1} parent=1 // loop_header
      %s19 = sphi 0, %s23
      %p20 = scmp.ge.s32.totalorder %s19, 4
      %s29 = sphi 0, %s31
      %s32 = sphi 0, %s29
      %s33 = sphi 0, %s32
      %s49 = sphi 0, %s33
      %s53 = sphi 0, %s53
      %s55 = sphi 0, %s53
      %s56 = sphi 0, %s55
      %s70 = sphi 0, %s56
      %s74 = sphi 0, %s74
      %s76 = sphi 0, %s74
      %s77 = sphi 0, %s76
      %s91 = sphi 0, %s77
      %s97 = sphi 0, %s99
      %s100 = sphi 0, %s97
      %s101 = sphi 0, %s100
      %s117 = sphi 0, %s101
      %s121 = sphi 0, %s121
      %s123 = sphi 0, %s121
      %s124 = sphi 0, %s123
      %s138 = sphi 0, %s124
      %s142 = sphi 0, %s142
      %s144 = sphi 0, %s142
      %s145 = sphi 0, %s144
      %s159 = sphi 0, %s145
      %s165 = sphi 0, %s167
      %s168 = sphi 0, %s165
      %s169 = sphi 0, %s168
      %s185 = sphi 0, %s169
    $region4: #{tpu_custom_call.1} parent=1 // loop_header_branch
      %22 = sbr.rel (%p20) target = $region8
    $region5: #{tpu_custom_call.1} parent=1 // loop_body
      %s24 = ssub.s32 %s19, 1
      %s25 = ssub.s32 %s19, 2
      %s26 = sadd.s32 %s19, 1
      %s27 = ssub.s32 %s19, %s26
      %p28 = scmp.eq.s32.totalorder %s27, 0
      %s30 = sadd.s32 %s29, 1
      %s31 = scalar_select %p28, %s29, %s30
      %p34 = pneg %p28
      %p35 = scmp.eq.s32.totalorder %s19, 1
      %p36 = por %p34, %p35
      %p37 = scmp.ne.s32.totalorder %s29, %s32
      %p38 = scmp.eq.s32.totalorder %s19, 0
      %p39 = por %p37, %p38
      %p40 = scmp.ne.s32.totalorder %s29, %s32
      %p41 = scmp.eq.s32.totalorder %s24, 1
      %p42 = por %p40, %p41
      %p43 = scmp.ne.s32.totalorder %s32, %s33
      %p44 = scmp.eq.s32.totalorder %s24, 0
      %p45 = por %p43, %p44
      %p46 = scmp.ne.s32.totalorder %s32, %s33
      %p47 = scmp.eq.s32.totalorder %s25, 1
      %p48 = por %p46, %p47
      %p50 = scmp.ne.s32.totalorder %s33, %s49
      %p51 = scmp.eq.s32.totalorder %s25, 0
      %p52 = por %p50, %p51
      %s54 = sadd.s32 %s53, 1
      %p57 = scmp.eq.s32.totalorder %s19, 1
      %p58 = scmp.ne.s32.totalorder %s53, %s55
      %p59 = scmp.eq.s32.totalorder %s19, 0
      %p60 = por %p58, %p59
      %p61 = scmp.ne.s32.totalorder %s53, %s55
      %p62 = scmp.eq.s32.totalorder %s24, 1
      %p63 = por %p61, %p62
      %p64 = scmp.ne.s32.totalorder %s55, %s56
      %p65 = scmp.eq.s32.totalorder %s24, 0
      %p66 = por %p64, %p65
      %p67 = scmp.ne.s32.totalorder %s55, %s56
      %p68 = scmp.eq.s32.totalorder %s25, 1
      %p69 = por %p67, %p68
      %p71 = scmp.ne.s32.totalorder %s56, %s70
      %p72 = scmp.eq.s32.totalorder %s25, 0
      %p73 = por %p71, %p72
      %s75 = sadd.s32 %s74, 1
      %p78 = scmp.eq.s32.totalorder %s19, 1
      %p79 = scmp.ne.s32.totalorder %s74, %s76
      %p80 = scmp.eq.s32.totalorder %s19, 0
      %p81 = por %p79, %p80
      %p82 = scmp.ne.s32.totalorder %s74, %s76
      %p83 = scmp.eq.s32.totalorder %s24, 1
      %p84 = por %p82, %p83
      %p85 = scmp.ne.s32.totalorder %s76, %s77
      %p86 = scmp.eq.s32.totalorder %s24, 0
      %p87 = por %p85, %p86
      %p88 = scmp.ne.s32.totalorder %s76, %s77
      %p89 = scmp.eq.s32.totalorder %s25, 1
      %p90 = por %p88, %p89
      %p92 = scmp.ne.s32.totalorder %s77, %s91
      %p93 = scmp.eq.s32.totalorder %s25, 0
      %p94 = por %p92, %p93
      %s95 = ssub.s32 %s19, %s26
      %p96 = scmp.eq.s32.totalorder %s95, 0
      %s98 = sadd.s32 %s97, 1
      %s99 = scalar_select %p96, %s97, %s98
      %p102 = pneg %p96
      %p103 = scmp.eq.s32.totalorder %s19, 1
      %p104 = por %p102, %p103
      %p105 = scmp.ne.s32.totalorder %s97, %s100
      %p106 = scmp.eq.s32.totalorder %s19, 0
      %p107 = por %p105, %p106
      %p108 = scmp.ne.s32.totalorder %s97, %s100
      %p109 = scmp.eq.s32.totalorder %s24, 1
      %p110 = por %p108, %p109
      %p111 = scmp.ne.s32.totalorder %s100, %s101
      %p112 = scmp.eq.s32.totalorder %s24, 0
      %p113 = por %p111, %p112
      %p114 = scmp.ne.s32.totalorder %s100, %s101
      %p115 = scmp.eq.s32.totalorder %s25, 1
      %p116 = por %p114, %p115
      %p118 = scmp.ne.s32.totalorder %s101, %s117
      %p119 = scmp.eq.s32.totalorder %s25, 0
      %p120 = por %p118, %p119
      %s122 = sadd.s32 %s121, 1
      %p125 = scmp.eq.s32.totalorder %s19, 1
      %p126 = scmp.ne.s32.totalorder %s121, %s123
      %p127 = scmp.eq.s32.totalorder %s19, 0
      %p128 = por %p126, %p127
      %p129 = scmp.ne.s32.totalorder %s121, %s123
      %p130 = scmp.eq.s32.totalorder %s24, 1
      %p131 = por %p129, %p130
      %p132 = scmp.ne.s32.totalorder %s123, %s124
      %p133 = scmp.eq.s32.totalorder %s24, 0
      %p134 = por %p132, %p133
      %p135 = scmp.ne.s32.totalorder %s123, %s124
      %p136 = scmp.eq.s32.totalorder %s25, 1
      %p137 = por %p135, %p136
      %p139 = scmp.ne.s32.totalorder %s124, %s138
      %p140 = scmp.eq.s32.totalorder %s25, 0
      %p141 = por %p139, %p140
      %s143 = sadd.s32 %s142, 1
      %p146 = scmp.eq.s32.totalorder %s19, 1
      %p147 = scmp.ne.s32.totalorder %s142, %s144
      %p148 = scmp.eq.s32.totalorder %s19, 0
      %p149 = por %p147, %p148
      %p150 = scmp.ne.s32.totalorder %s142, %s144
      %p151 = scmp.eq.s32.totalorder %s24, 1
      %p152 = por %p150, %p151
      %p153 = scmp.ne.s32.totalorder %s144, %s145
      %p154 = scmp.eq.s32.totalorder %s24, 0
      %p155 = por %p153, %p154
      %p156 = scmp.ne.s32.totalorder %s144, %s145
      %p157 = scmp.eq.s32.totalorder %s25, 1
      %p158 = por %p156, %p157
      %p160 = scmp.ne.s32.totalorder %s145, %s159
      %p161 = scmp.eq.s32.totalorder %s25, 0
      %p162 = por %p160, %p161
      %s163 = ssub.s32 %s19, %s26
      %p164 = scmp.eq.s32.totalorder %s163, 0
      %s166 = sadd.s32 %s165, 1
      %s167 = scalar_select %p164, %s165, %s166
      %p170 = pneg %p164
      %p171 = scmp.eq.s32.totalorder %s19, 1
      %p172 = por %p170, %p171
      %p173 = scmp.ne.s32.totalorder %s165, %s168
      %p174 = scmp.eq.s32.totalorder %s19, 0
      %p175 = por %p173, %p174
      %p176 = scmp.ne.s32.totalorder %s165, %s168
      %p177 = scmp.eq.s32.totalorder %s24, 1
      %p178 = por %p176, %p177
      %p179 = scmp.ne.s32.totalorder %s168, %s169
      %p180 = scmp.eq.s32.totalorder %s24, 0
      %p181 = por %p179, %p180
      %p182 = scmp.ne.s32.totalorder %s168, %s169
      %p183 = scmp.eq.s32.totalorder %s25, 1
      %p184 = por %p182, %p183
      %p186 = scmp.ne.s32.totalorder %s169, %s185
      %p187 = scmp.eq.s32.totalorder %s25, 0
      %p188 = por %p186, %p187
      %p189 = scmp.le.s32.totalorder 1, %s19
      %p190 = scmp.lt.s32.totalorder %s19, 3
      %p191 = pnand %p189, %p190
      %p192 = pneg %p191
      // Predicated region
      $region9: #{tpu_custom_call.1} parent=5 // pred_check
        _
      $region10: #{tpu_custom_call.1} parent=5 // pred_check_branch
        %194 = sbr.rel (%p191) target = $region12
      $region11: #{tpu_custom_call.1} parent=5 // pred_region
        %s195 = ssub.s32 %s19, 1
        // Predicated region
        $region13: #{tpu_custom_call.1} parent=11 // pred_check
          %p196 = pneg %p66
        $region14: #{tpu_custom_call.1} parent=11 // pred_check_branch
          %198 = sbr.rel (%p196) target = $region16
        $region15: #{tpu_custom_call.1} parent=11 // pred_region
          %s200 = ssub.s32 8192, 8192
          %201 = vsyncadd [#allocation6], %s200
          %s202 = sshll.u32 [#allocation5], 4
          %s203 = int_to_ptr.vmem [resolvable:$true] %s202
          %208 = dma.hbm_to_vmem [thread:$0]  %s1, 8192, %s203, [#allocation6], 128, 128, 8
        $region16: #{tpu_custom_call.1} parent=11 // pred_fallthru
          _
        // Predicated region
        $region17: #{tpu_custom_call.1} parent=11 // pred_check
          %p209 = pneg %p87
        $region18: #{tpu_custom_call.1} parent=11 // pred_check_branch
          %211 = sbr.rel (%p209) target = $region20
        $region19: #{tpu_custom_call.1} parent=11 // pred_region
          _
        $region20: #{tpu_custom_call.1} parent=11 // pred_fallthru
          _
        // Predicated region
        $region21: #{tpu_custom_call.1} parent=11 // pred_check
          %p212 = pneg %p134
        $region22: #{tpu_custom_call.1} parent=11 // pred_check_branch
          %214 = sbr.rel (%p212) target = $region24
        $region23: #{tpu_custom_call.1} parent=11 // pred_region
          _
        $region24: #{tpu_custom_call.1} parent=11 // pred_fallthru
          _
        // Predicated region
        $region25: #{tpu_custom_call.1} parent=11 // pred_check
          %p215 = pneg %p155
        $region26: #{tpu_custom_call.1} parent=11 // pred_check_branch
          %217 = sbr.rel (%p215) target = $region28
        $region27: #{tpu_custom_call.1} parent=11 // pred_region
          _
        $region28: #{tpu_custom_call.1} parent=11 // pred_fallthru
          _
      $region12: #{tpu_custom_call.1} parent=5 // pred_fallthru
        _
      %p218 = scmp.lt.s32.totalorder %s19, 2
      // Predicated region
      $region29: #{tpu_custom_call.1} parent=5 // pred_check
        %p219 = pneg %p218
      $region30: #{tpu_custom_call.1} parent=5 // pred_check_branch
        %221 = sbr.rel (%p219) target = $region32
      $region31: #{tpu_custom_call.1} parent=5 // pred_region
        // Predicated region
        $region33: #{tpu_custom_call.1} parent=31 // pred_check
          %p222 = pneg %p39
        $region34: #{tpu_custom_call.1} parent=31 // pred_check_branch
          %224 = sbr.rel (%p222) target = $region36
        $region35: #{tpu_custom_call.1} parent=31 // pred_region
          %s225 = sand.u32 %s19, 1
          %s226 = scalar_lea.sflag [#allocation3], %s225
          %s227 = sand.u32 %s29, 1
          %s228 = smul.addr %s227, 32
          %s229 = scalar_lea.vmem [#allocation2], %s228
          %s231 = ssub.s32 512, 512
          %232 = vsyncadd %s226, %s231
          %s233 = smul.addr %s19, 4
          %s234 = smul.addr %s233, 128
          %s235 = scalar_lea.hbm %s0, %s234
          %s237 = sshll.u32 %s229, 4
          %s238 = int_to_ptr.vmem [resolvable:$true] %s237
          %240 = dma.hbm_to_vmem [thread:$0]  %s235, 512, %s238, %s226
        $region36: #{tpu_custom_call.1} parent=31 // pred_fallthru
          _
        // Predicated region
        $region37: #{tpu_custom_call.1} parent=31 // pred_check
          %p241 = pneg %p107
        $region38: #{tpu_custom_call.1} parent=31 // pred_check_branch
          %243 = sbr.rel (%p241) target = $region40
        $region39: #{tpu_custom_call.1} parent=31 // pred_region
          %s244 = sand.u32 %s19, 1
          %s245 = scalar_lea.sflag [#allocation3], %s244
          %s246 = sand.u32 %s97, 1
          %s247 = smul.addr %s246, 8
          %s248 = scalar_lea.vmem [#allocation7], %s247
          %s250 = ssub.s32 128, 128
          %251 = vsyncadd %s245, %s250
          %s252 = smul.addr %s19, 128
          %s253 = scalar_lea.hbm %s3, %s252
          %s255 = sshll.u32 %s248, 4
          %s256 = int_to_ptr.vmem [resolvable:$true] %s255
          %258 = dma.hbm_to_vmem [thread:$0]  %s253, 128, %s256, %s245
        $region40: #{tpu_custom_call.1} parent=31 // pred_fallthru
          _
      $region32: #{tpu_custom_call.1} parent=5 // pred_fallthru
        _
      %p259 = scmp.le.s32.totalorder 1, %s19
      %p260 = scmp.lt.s32.totalorder %s19, 3
      %p261 = pnand %p259, %p260
      %p262 = pneg %p261
      // Predicated region
      $region41: #{tpu_custom_call.1} parent=5 // pred_check
        _
      $region42: #{tpu_custom_call.1} parent=5 // pred_check_branch
        %264 = sbr.rel (%p261) target = $region44
      $region43: #{tpu_custom_call.1} parent=5 // pred_region
        %s265 = ssub.s32 %s19, 1
        %s266 = sand.u32 %s24, 1
        %s267 = scalar_lea.sflag [#allocation3], %s266
        %s268 = sand.u32 %s32, 1
        %s269 = smul.addr %s268, 32
        %s270 = scalar_lea.vmem [#allocation2], %s269
        // Predicated region
        $region45: #{tpu_custom_call.1} parent=43 // pred_check
          %p271 = pneg %p45
        $region46: #{tpu_custom_call.1} parent=43 // pred_check_branch
          %273 = sbr.rel (%p271) target = $region48
        $region47: #{tpu_custom_call.1} parent=43 // pred_region
          %274 = dma.done %s267, 512
        $region48: #{tpu_custom_call.1} parent=43 // pred_fallthru
          _
        // Predicated region
        $region49: #{tpu_custom_call.1} parent=43 // pred_check
          %p275 = pneg %p66
        $region50: #{tpu_custom_call.1} parent=43 // pred_check_branch
          %277 = sbr.rel (%p275) target = $region52
        $region51: #{tpu_custom_call.1} parent=43 // pred_region
          %278 = dma.done [#allocation6], 8192
        $region52: #{tpu_custom_call.1} parent=43 // pred_fallthru
          _
        %s279 = sand.u32 %s24, 1
        %s280 = scalar_lea.sflag [#allocation3], %s279
        %s281 = sand.u32 %s100, 1
        %s282 = smul.addr %s281, 8
        %s283 = scalar_lea.vmem [#allocation7], %s282
        // Predicated region
        $region53: #{tpu_custom_call.1} parent=43 // pred_check
          %p284 = pneg %p113
        $region54: #{tpu_custom_call.1} parent=43 // pred_check_branch
          %286 = sbr.rel (%p284) target = $region56
        $region55: #{tpu_custom_call.1} parent=43 // pred_region
          %287 = dma.done %s280, 128
        $region56: #{tpu_custom_call.1} parent=43 // pred_fallthru
          _
        %s288 = sand.u32 %s24, 1
        %s289 = scalar_lea.sflag [#allocation3], %s288
        %s290 = sand.u32 %s32, 1
        %s291 = smul.addr %s290, 32
        %s292 = scalar_lea.vmem [#allocation2], %s291
        %p293 = pneg %p45
        %p294 = pneg %p42
        %p295 = pneg %p66
        %p296 = pneg %p63
        %p297 = pneg %p87
        %p298 = pneg %p84
        %s299 = sand.u32 %s24, 1
        %s300 = scalar_lea.sflag [#allocation3], %s299
        %s301 = sand.u32 %s100, 1
        %s302 = smul.addr %s301, 8
        %s303 = scalar_lea.vmem [#allocation7], %s302
        %p304 = pneg %p113
        %p305 = pneg %p110
        %p306 = pneg %p134
        %p307 = pneg %p131
        %p308 = pneg %p155
        %p309 = pneg %p152
        %p310 = pneg %p181
        %p311 = pneg %p178
        %s312 = sand.u32 %s168, 1
        %s313 = scalar_lea.sflag [#allocation4], %s312
        %s314 = sand.u32 %s168, 1
        %s315 = smul.addr %s314, 8
        %s316 = scalar_lea.vmem [#allocation8], %s315
        %v317 = vld [vmem:[%s270] sm:$0xff]
        %v318 = vld [vmem:[%s270 + $0x8] sm:$0xff]
        %v319 = vld [vmem:[%s270 + $0x10] sm:$0xff]
        %v320 = vld [vmem:[%s270 + $0x18] sm:$0xff]
        %v321 = vld [vmem:[#allocation5] sm:$0xff]
        %v322 = vld [vmem:[#allocation5 + $0x8] sm:$0xff]
        %v323 = vld [vmem:[#allocation5 + $0x10] sm:$0xff]
        %v324 = vld [vmem:[#allocation5 + $0x18] sm:$0xff]
        %v325 = vld [vmem:[#allocation5 + $0x20] sm:$0xff]
        %v326 = vld [vmem:[#allocation5 + $0x28] sm:$0xff]
        %v327 = vld [vmem:[#allocation5 + $0x30] sm:$0xff]
        %v328 = vld [vmem:[#allocation5 + $0x38] sm:$0xff]
        %v329 = vld [vmem:[#allocation5 + $0x40] sm:$0xff]
        %v330 = vld [vmem:[#allocation5 + $0x48] sm:$0xff]
        %v331 = vld [vmem:[#allocation5 + $0x50] sm:$0xff]
        %v332 = vld [vmem:[#allocation5 + $0x58] sm:$0xff]
        %v333 = vld [vmem:[#allocation5 + $0x60] sm:$0xff]
        %v334 = vld [vmem:[#allocation5 + $0x68] sm:$0xff]
        %v335 = vld [vmem:[#allocation5 + $0x70] sm:$0xff]
        %v336 = vld [vmem:[#allocation5 + $0x78] sm:$0xff]
        %v337 = vld [vmem:[#allocation5 + $0x80] sm:$0xff]
        %v338 = vld [vmem:[#allocation5 + $0x88] sm:$0xff]
        %v339 = vld [vmem:[#allocation5 + $0x90] sm:$0xff]
        %v340 = vld [vmem:[#allocation5 + $0x98] sm:$0xff]
        %v341 = vld [vmem:[#allocation5 + $0xa0] sm:$0xff]
        %v342 = vld [vmem:[#allocation5 + $0xa8] sm:$0xff]
        %v343 = vld [vmem:[#allocation5 + $0xb0] sm:$0xff]
        %v344 = vld [vmem:[#allocation5 + $0xb8] sm:$0xff]
        %v345 = vld [vmem:[#allocation5 + $0xc0] sm:$0xff]
        %v346 = vld [vmem:[#allocation5 + $0xc8] sm:$0xff]
        %v347 = vld [vmem:[#allocation5 + $0xd0] sm:$0xff]
        %v348 = vld [vmem:[#allocation5 + $0xd8] sm:$0xff]
        %v349 = vld [vmem:[#allocation5 + $0xe0] sm:$0xff]
        %v350 = vld [vmem:[#allocation5 + $0xe8] sm:$0xff]
        %v351 = vld [vmem:[#allocation5 + $0xf0] sm:$0xff]
        %v352 = vld [vmem:[#allocation5 + $0xf8] sm:$0xff]
        %v353 = vld [vmem:[#allocation5 + $0x100] sm:$0xff]
        %v354 = vld [vmem:[#allocation5 + $0x108] sm:$0xff]
        %v355 = vld [vmem:[#allocation5 + $0x110] sm:$0xff]
        %v356 = vld [vmem:[#allocation5 + $0x118] sm:$0xff]
        %v357 = vld [vmem:[#allocation5 + $0x120] sm:$0xff]
        %v358 = vld [vmem:[#allocation5 + $0x128] sm:$0xff]
        %v359 = vld [vmem:[#allocation5 + $0x130] sm:$0xff]
        %v360 = vld [vmem:[#allocation5 + $0x138] sm:$0xff]
        %v361 = vld [vmem:[#allocation5 + $0x140] sm:$0xff]
        %v362 = vld [vmem:[#allocation5 + $0x148] sm:$0xff]
        %v363 = vld [vmem:[#allocation5 + $0x150] sm:$0xff]
        %v364 = vld [vmem:[#allocation5 + $0x158] sm:$0xff]
        %v365 = vld [vmem:[#allocation5 + $0x160] sm:$0xff]
        %v366 = vld [vmem:[#allocation5 + $0x168] sm:$0xff]
        %v367 = vld [vmem:[#allocation5 + $0x170] sm:$0xff]
        %v368 = vld [vmem:[#allocation5 + $0x178] sm:$0xff]
        %v369 = vld [vmem:[#allocation5 + $0x180] sm:$0xff]
        %v370 = vld [vmem:[#allocation5 + $0x188] sm:$0xff]
        %v371 = vld [vmem:[#allocation5 + $0x190] sm:$0xff]
        %v372 = vld [vmem:[#allocation5 + $0x198] sm:$0xff]
        %v373 = vld [vmem:[#allocation5 + $0x1a0] sm:$0xff]
        %v374 = vld [vmem:[#allocation5 + $0x1a8] sm:$0xff]
        %v375 = vld [vmem:[#allocation5 + $0x1b0] sm:$0xff]
        %v376 = vld [vmem:[#allocation5 + $0x1b8] sm:$0xff]
        %v377 = vld [vmem:[#allocation5 + $0x1c0] sm:$0xff]
        %v378 = vld [vmem:[#allocation5 + $0x1c8] sm:$0xff]
        %v379 = vld [vmem:[#allocation5 + $0x1d0] sm:$0xff]
        %v380 = vld [vmem:[#allocation5 + $0x1d8] sm:$0xff]
        %v381 = vld [vmem:[#allocation5 + $0x1e0] sm:$0xff]
        %v382 = vld [vmem:[#allocation5 + $0x1e8] sm:$0xff]
        %v383 = vld [vmem:[#allocation5 + $0x1f0] sm:$0xff]
        %v384 = vld [vmem:[#allocation5 + $0x1f8] sm:$0xff]
        %v385 = vld [vmem:[%s2] sm:$0x1]
        %v387 = vlaneseq
        %v388 = vshrl.u32 %v387, 7
        %v389 = vsub.s32 0, %v388
        %v390 = vrot.slane %v385, %v389
        %392 = vmatprep.subr.mxu0 0.0
        %393 = vmatpush1.msra.mxu0 %v321
        %394 = vmatprep.subr.mxu0 0.0
        %395 = vmatpush1.msra.mxu0 %v322
        %396 = vmatprep.subr.mxu0 0.0
        %397 = vmatpush1.msra.mxu0 %v323
        %398 = vmatprep.subr.mxu0 0.0
        %399 = vmatpush1.msra.mxu0 %v324
        %400 = vmatprep.subr.mxu0 0.0
        %401 = vmatpush1.msra.mxu0 %v325
        %402 = vmatprep.subr.mxu0 0.0
        %403 = vmatpush1.msra.mxu0 %v326
        %404 = vmatprep.subr.mxu0 0.0
        %405 = vmatpush1.msra.mxu0 %v327
        %406 = vmatprep.subr.mxu0 0.0
        %407 = vmatpush1.msra.mxu0 %v328
        %408 = vmatprep.subr.mxu0 0.0
        %409 = vmatpush1.msra.mxu0 %v329
        %410 = vmatprep.subr.mxu0 0.0
        %411 = vmatpush1.msra.mxu0 %v330
        %412 = vmatprep.subr.mxu0 0.0
        %413 = vmatpush1.msra.mxu0 %v331
        %414 = vmatprep.subr.mxu0 0.0
        %415 = vmatpush1.msra.mxu0 %v332
        %416 = vmatprep.subr.mxu0 0.0
        %417 = vmatpush1.msra.mxu0 %v333
        %418 = vmatprep.subr.mxu0 0.0
        %419 = vmatpush1.msra.mxu0 %v334
        %420 = vmatprep.subr.mxu0 0.0
        %421 = vmatpush1.msra.mxu0 %v335
        %422 = vmatprep.subr.mxu0 0.0
        %423 = vmatpush1.msra.mxu0 %v336
        %424 = vmatprep.subr.mxu0 0.0
        %425 = vmatpush1.msra.mxu0 %v337
        %426 = vmatprep.subr.mxu0 0.0
        %427 = vmatpush1.msra.mxu0 %v338
        %428 = vmatprep.subr.mxu0 0.0
        %429 = vmatpush1.msra.mxu0 %v339
        %430 = vmatprep.subr.mxu0 0.0
        %431 = vmatpush1.msra.mxu0 %v340
        %432 = vmatprep.subr.mxu0 0.0
        %433 = vmatpush1.msra.mxu0 %v341
        %434 = vmatprep.subr.mxu0 0.0
        %435 = vmatpush1.msra.mxu0 %v342
        %436 = vmatprep.subr.mxu0 0.0
        %437 = vmatpush1.msra.mxu0 %v343
        %438 = vmatprep.subr.mxu0 0.0
        %439 = vmatpush1.msra.mxu0 %v344
        %440 = vmatprep.subr.mxu0 0.0
        %441 = vmatpush1.msra.mxu0 %v345
        %442 = vmatprep.subr.mxu0 0.0
        %443 = vmatpush1.msra.mxu0 %v346
        %444 = vmatprep.subr.mxu0 0.0
        %445 = vmatpush1.msra.mxu0 %v347
        %446 = vmatprep.subr.mxu0 0.0
        %447 = vmatpush1.msra.mxu0 %v348
        %448 = vmatprep.subr.mxu0 0.0
        %449 = vmatpush1.msra.mxu0 %v349
        %450 = vmatprep.subr.mxu0 0.0
        %451 = vmatpush1.msra.mxu0 %v350
        %452 = vmatprep.subr.mxu0 0.0
        %453 = vmatpush1.msra.mxu0 %v351
        %454 = vmatprep.subr.mxu0 0.0
        %455 = vmatpush1.msra.mxu0 %v352
        %456 = vmatprep.mubr.f32.mxu0 %v318
        %457 = vmatmul.mubr.f32.gmra.mrb[0].mxu0 %v317
        %v458 = vpop.f32.mrb[0].mxu0
        %v459 = vadd.f32 %v390, %v458
        %v460 = vpop.f32.mrb[0].mxu0
        %461 = vdwg.mxu0
        %462 = vmatprep.subr.mxu0 0.0
        %463 = vmatpush1.msra.mxu0 %v353
        %464 = vmatprep.subr.mxu0 0.0
        %465 = vmatpush1.msra.mxu0 %v354
        %466 = vmatprep.subr.mxu0 0.0
        %467 = vmatpush1.msra.mxu0 %v355
        %468 = vmatprep.subr.mxu0 0.0
        %469 = vmatpush1.msra.mxu0 %v356
        %470 = vmatprep.subr.mxu0 0.0
        %471 = vmatpush1.msra.mxu0 %v357
        %472 = vmatprep.subr.mxu0 0.0
        %473 = vmatpush1.msra.mxu0 %v358
        %474 = vmatprep.subr.mxu0 0.0
        %475 = vmatpush1.msra.mxu0 %v359
        %476 = vmatprep.subr.mxu0 0.0
        %477 = vmatpush1.msra.mxu0 %v360
        %478 = vmatprep.subr.mxu0 0.0
        %479 = vmatpush1.msra.mxu0 %v361
        %480 = vmatprep.subr.mxu0 0.0
        %481 = vmatpush1.msra.mxu0 %v362
        %482 = vmatprep.subr.mxu0 0.0
        %483 = vmatpush1.msra.mxu0 %v363
        %484 = vmatprep.subr.mxu0 0.0
        %485 = vmatpush1.msra.mxu0 %v364
        %486 = vmatprep.subr.mxu0 0.0
        %487 = vmatpush1.msra.mxu0 %v365
        %488 = vmatprep.subr.mxu0 0.0
        %489 = vmatpush1.msra.mxu0 %v366
        %490 = vmatprep.subr.mxu0 0.0
        %491 = vmatpush1.msra.mxu0 %v367
        %492 = vmatprep.subr.mxu0 0.0
        %493 = vmatpush1.msra.mxu0 %v368
        %494 = vmatprep.subr.mxu0 0.0
        %495 = vmatpush1.msra.mxu0 %v369
        %496 = vmatprep.subr.mxu0 0.0
        %497 = vmatpush1.msra.mxu0 %v370
        %498 = vmatprep.subr.mxu0 0.0
        %499 = vmatpush1.msra.mxu0 %v371
        %500 = vmatprep.subr.mxu0 0.0
        %501 = vmatpush1.msra.mxu0 %v372
        %502 = vmatprep.subr.mxu0 0.0
        %503 = vmatpush1.msra.mxu0 %v373
        %504 = vmatprep.subr.mxu0 0.0
        %505 = vmatpush1.msra.mxu0 %v374
        %506 = vmatprep.subr.mxu0 0.0
        %507 = vmatpush1.msra.mxu0 %v375
        %508 = vmatprep.subr.mxu0 0.0
        %509 = vmatpush1.msra.mxu0 %v376
        %510 = vmatprep.subr.mxu0 0.0
        %511 = vmatpush1.msra.mxu0 %v377
        %512 = vmatprep.subr.mxu0 0.0
        %513 = vmatpush1.msra.mxu0 %v378
        %514 = vmatprep.subr.mxu0 0.0
        %515 = vmatpush1.msra.mxu0 %v379
        %516 = vmatprep.subr.mxu0 0.0
        %517 = vmatpush1.msra.mxu0 %v380
        %518 = vmatprep.subr.mxu0 0.0
        %519 = vmatpush1.msra.mxu0 %v381
        %520 = vmatprep.subr.mxu0 0.0
        %521 = vmatpush1.msra.mxu0 %v382
        %522 = vmatprep.subr.mxu0 0.0
        %523 = vmatpush1.msra.mxu0 %v383
        %524 = vmatprep.subr.mxu0 0.0
        %525 = vmatpush1.msra.mxu0 %v384
        %526 = vmatprep.mubr.f32.mxu0 %v320
        %527 = vmatmul.mubr.f32.gmra.mrb[0].mxu0 %v319
        %v528 = vpop.f32.mrb[0].mxu0
        %v529 = vadd.f32 %v459, %v528
        %v530 = vpop.f32.mrb[0].mxu0
        %531 = vdwg.mxu0
        %v532 = vld [vmem:[%s283] sm:$0xff]
        %v533 = vadd.f32 %v529, %v532
        %534 = vadd.xlane.f32.xlu0 %v533
        %v535 = vpop.xlane.xlu0 %534
        %v536 = vmul.f32 %v535, 0.0078125
        %v537 = vsub.f32 %v533, %v536
        %v538 = vmul.f32 %v537, %v537
        %539 = vadd.xlane.f32.xlu0 %v538
        %v540 = vpop.xlane.xlu0 %539
        %v541 = vmul.f32 %v540, 0.0078125
        %v542 = vadd.f32 %v541, 1e-12
        %v543 = vrsqrt.pop %v542
        %v544 = vmul.f32 %v537, %v543
        %v545 = vld [vmem:[%s4] sm:$0x1]
        %v547 = vlaneseq
        %v548 = vshrl.u32 %v547, 7
        %v549 = vsub.s32 0, %v548
        %v550 = vrot.slane %v545, %v549
        %v552 = vmul.f32 %v544, %v550
        %v553 = vld [vmem:[%s5] sm:$0x1]
        %v555 = vlaneseq
        %v556 = vshrl.u32 %v555, 7
        %v557 = vsub.s32 0, %v556
        %v558 = vrot.slane %v553, %v557
        %v560 = vadd.f32 %v552, %v558
        %561 = vst [vmem:[%s316] sm:$0xff] %v560
        %s562 = sand.u32 %s168, 1
        %s563 = scalar_lea.sflag [#allocation4], %s562
        %s564 = sand.u32 %s168, 1
        %s565 = smul.addr %s564, 8
        %s566 = scalar_lea.vmem [#allocation8], %s565
        // Predicated region
        $region57: #{tpu_custom_call.1} parent=43 // pred_check
          %p567 = pneg %p178
        $region58: #{tpu_custom_call.1} parent=43 // pred_check_branch
          %569 = sbr.rel (%p567) target = $region60
        $region59: #{tpu_custom_call.1} parent=43 // pred_region
          %s571 = ssub.s32 128, 128
          %572 = vsyncadd %s563, %s571
          %s573 = smul.addr %s24, 128
          %s574 = scalar_lea.hbm %s6, %s573
          %s576 = sshll.u32 %s566, 4
          %s577 = int_to_ptr.vmem [resolvable:$true] %s576
          %579 = dma.vmem_to_hbm [thread:$0]  %s577, 128, %s574, %s563
        $region60: #{tpu_custom_call.1} parent=43 // pred_fallthru
          _
      $region44: #{tpu_custom_call.1} parent=5 // pred_fallthru
        _
      %p580 = scmp.le.s32.totalorder 2, %s19
      // Predicated region
      $region61: #{tpu_custom_call.1} parent=5 // pred_check
        %p581 = pneg %p580
      $region62: #{tpu_custom_call.1} parent=5 // pred_check_branch
        %583 = sbr.rel (%p581) target = $region64
      $region63: #{tpu_custom_call.1} parent=5 // pred_region
        %s584 = ssub.s32 %s19, 2
        // Predicated region
        $region65: #{tpu_custom_call.1} parent=63 // pred_check
          %p585 = pneg %p184
        $region66: #{tpu_custom_call.1} parent=63 // pred_check_branch
          %587 = sbr.rel (%p585) target = $region68
        $region67: #{tpu_custom_call.1} parent=63 // pred_region
          %s588 = sand.u32 %s169, 1
          %s589 = scalar_lea.sflag [#allocation4], %s588
          %s590 = sand.u32 %s169, 1
          %s591 = smul.addr %s590, 8
          %s592 = scalar_lea.vmem [#allocation8], %s591
          %593 = dma.done %s589, 128
        $region68: #{tpu_custom_call.1} parent=63 // pred_fallthru
          _
      $region64: #{tpu_custom_call.1} parent=5 // pred_fallthru
        _
    $region6: #{tpu_custom_call.1} parent=1 // loop_footer
      %s23 = sadd.s32 1, %s19
    $region7: #{tpu_custom_call.1} parent=1 // loop_footer_branch
      %18 = sbr.rel target = $region3
    $region8: #{tpu_custom_call.1} parent=1 // loop_exit
      _
    %594 = vsyncpa [#allocation3], 1
    %s595 = scalar_lea.sflag [#allocation3], 1
    %596 = vsyncpa %s595, 1
    %597 = vsyncpa [#allocation6], 1
    %598 = vsyncpa [#allocation4], 1
    %s599 = scalar_lea.sflag [#allocation4], 1
    %600 = vsyncpa %s599, 1

</llo_original>
